<compile_context>
chip_gen: v7x
topology: tpu7x:2x2x1
jax: 0.10.0
libtpu: 0.0.40
codegen_flags: <defaults>
</compile_context>

<pallas_src>
from typing import NamedTuple

import numpy as np
import jax
import jax.numpy as jnp
from jax.experimental import pallas as pl
from jax.experimental.pallas import tpu as pltpu

P_LANES = 128  # padded node+output lane width (one f32 vreg wide)


# ---------------------------------------------------------------------------
# Nonlinearities (NONLINEARITY_MAP): 0 ReLU, 1 Tanh, 2 LeakyReLU, 3 Identity,
# 4 Sine, 5 Softplus, 6 SoftMinus.  Works with xp = jnp (in-kernel) or np (ref).
# ---------------------------------------------------------------------------
def _softplus(x, xp):
    return xp.maximum(x, 0.0) + xp.log(1.0 + xp.exp(-xp.abs(x)))


def _act(nl_id, x, xp=jnp):
    if nl_id == 0:      # nn.ReLU
        return xp.maximum(x, 0.0)
    elif nl_id == 1:    # nn.Tanh
        return xp.tanh(x)
    elif nl_id == 2:    # nn.LeakyReLU (default slope 0.01)
        return xp.where(x >= 0, x, 0.01 * x)
    elif nl_id == 3:    # nn.Identity
        return x
    elif nl_id == 4:    # SineActivation
        return xp.sin(x)
    elif nl_id == 5:    # nn.Softplus
        return _softplus(x, xp)
    elif nl_id == 6:    # SoftMinus = -softplus(-x)
        return -_softplus(-x, xp)
    raise ValueError(f"unknown nonlinearity id {nl_id}")


# ---------------------------------------------------------------------------
# Packed-parameter slab layout (single input DMA; ALL topology masks included
# so the kernel captures no array constants):
#   rows [0, 128)            : node-0 weights, zero-padded to (128, 128)
#   row  b0_row              : node-0 bias (zero-embedded on node-0 output lanes)
#   row  bc_row              : [bmid | blast | 0] combined bias row
#   row  mask0_row           : node-0 scatter mask (adj[0])
#   row  omask_row           : output-lane mask (lanes [N, N+output_dim))
#   rows [wc_row0, +128)     : Wc = [wmid | wlast | 0]       (sublane aligned)
#   rows [id_row0, +N)       : per-node one-hot state-write rows
# ---------------------------------------------------------------------------
class SlabLayout(NamedTuple):
    b0_row: int
    bc_row: int
    mask0_row: int
    omask_row: int
    wc_row0: int
    id_row0: int
    n_rows: int


def _slab_layout(n_nodes):
    b0_row = P_LANES
    bc_row = P_LANES + 1
    mask0_row = P_LANES + 2
    omask_row = P_LANES + 3
    wc_row0 = ((P_LANES + 4 + 7) // 8) * 8          # 136, sublane-aligned
    id_row0 = wc_row0 + P_LANES                     # 264
    n_rows = ((id_row0 + n_nodes + 7) // 8) * 8
    return SlabLayout(b0_row, bc_row, mask0_row, omask_row, wc_row0, id_row0, n_rows)


# ---------------------------------------------------------------------------
# Pallas kernel
# ---------------------------------------------------------------------------
def make_progressive_rnn_kernel(n_nodes, nonlin_ids, L: SlabLayout):
    N = n_nodes
    HI = jax.lax.Precision.HIGHEST  # tiny matmuls; extra passes hidden by node chain

    def kernel(x_ref, slab_ref, out_ref):
        x = x_ref[...]                                       # (Bt, 128) lane-padded input
        w0 = slab_ref[0:P_LANES, :]                          # (128, 128) zero-padded
        b0 = slab_ref[L.b0_row:L.b0_row + 1, :]              # (1, 128)
        bc = slab_ref[L.bc_row:L.bc_row + 1, :]              # (1, 128) [bmid|blast|0]
        mask0 = slab_ref[L.mask0_row:L.mask0_row + 1, :]     # (1, 128) adj[0] scatter mask
        out_mask = slab_ref[L.omask_row:L.omask_row + 1, :]  # (1, 128) output lanes
        wc = slab_ref[L.wc_row0:L.wc_row0 + P_LANES, :]      # (128, 128) [wmid|wlast|0]

        # node 0: Linear(input_dim, adj[0].sum()) + nonlin, scattered into state.
        pre0 = jnp.dot(x, w0, preferred_element_type=jnp.float32, precision=HI) + b0
        s = _act(nonlin_ids[0], pre0) * mask0                # (Bt,128) state, 0 elsewhere

        # One MXU pass builds all middle-node + output pre-activations from s.
        acc = jnp.dot(s, wc, preferred_element_type=jnp.float32, precision=HI) + bc

        bt = x.shape[0]
        # Middle nodes: inherently sequential, pure-VPU rank-1 updates.
        # (val - s_old) converts the node-0-time contribution of lane n into the
        # post-overwrite value, keeping every downstream pre-activation exact,
        # matching the torch gather/scatter semantics in index order.
        for n in range(1, N - 1):
            s_old = s[:, n:n + 1]                            # lane-n value used in acc
            val = _act(nonlin_ids[n], acc[:, n:n + 1])       # (Bt, 1)
            delta_b = jnp.broadcast_to(val - s_old, (bt, P_LANES))  # one lane-broadcast
            wc_row = slab_ref[L.wc_row0 + n:L.wc_row0 + n + 1, :]   # re-read from VMEM
            id_row = slab_ref[L.id_row0 + n:L.id_row0 + n + 1, :]   # one-hot state row
            acc = acc + delta_b * wc_row                     # propagate new value
            s = s + delta_b * id_row                         # state[:, n] = val

        # Last node: output pre-activations already accumulated in lanes [N, N+out).
        out_full = _act(nonlin_ids[N - 1], acc) * out_mask
        out_ref[...] = s + out_full                          # single lane-dense store

    return kernel


def _pick_batch_tile(batch):
    # Multiple of 8 (f32 sublanes), capped at 128 (vreg pressure), and >= 2 grid
    # steps whenever batch >= 16 so a v7x megacore can shard the batch axis.
    half = -(-batch // 2)
    bt = ((half + 7) // 8) * 8
    return int(max(8, min(128, bt)))


def progressive_rnn_forward(x, slab, *, n_nodes, input_dim, output_dim, nonlin_ids):
    assert n_nodes + output_dim <= P_LANES, "state + output must fit in 128 lanes"
    assert input_dim <= P_LANES, "input_dim must be <= 128"
    L = _slab_layout(n_nodes)
    assert slab.shape == (L.n_rows, P_LANES), "slab does not match layout"

    batch = x.shape[0]
    bt = _pick_batch_tile(batch)
    pad_b = (-batch) % bt
    x = jnp.pad(x, ((0, pad_b), (0, P_LANES - input_dim)))   # lane-dense (B_pad, 128)
    bpad = x.shape[0]
    grid = (bpad // bt,)

    kernel = make_progressive_rnn_kernel(n_nodes, nonlin_ids, L)
    combined = pl.pallas_call(
        kernel,
        grid=grid,
        in_specs=[
            pl.BlockSpec((bt, P_LANES), lambda i: (i, 0)),
            pl.BlockSpec(slab.shape, lambda i: (0, 0)),      # constant index -> resident
        ],
        out_specs=pl.BlockSpec((bt, P_LANES), lambda i: (i, 0)),
        out_shape=jax.ShapeDtypeStruct((bpad, P_LANES), jnp.float32),
        compiler_params=pltpu.CompilerParams(
            dimension_semantics=("parallel",)),               # shard batch tiles over TCs
    )(x, slab)

    combined = combined[:batch]
    state = combined[:, :n_nodes]
    out = combined[:, n_nodes:n_nodes + output_dim]
    return out, state


# ---------------------------------------------------------------------------
# Deterministic parameter construction (mirrors ProgressiveRNN.generate_network
# + _init_weights shapes; kaiming-style std, bias std=0.1), packed into one slab
# together with all topology masks.
# ---------------------------------------------------------------------------
def build_params(key, adj, input_dim, output_dim):
    n_nodes = adj.shape[0]
    N = n_nodes
    L = _slab_layout(n_nodes)
    keys = jax.random.split(key, 2 * n_nodes)
    raw_w, raw_b = [], []

    # node 0: Linear(input_dim, adj[0].sum())
    k0 = int(adj[0].sum())
    w = np.asarray(jax.random.normal(keys[0], (k0, input_dim), jnp.float32))
    raw_w.append((w * np.sqrt(2.0 / input_dim)).astype(np.float32))
    raw_b.append((np.asarray(jax.random.normal(keys[1], (k0,), jnp.float32)) * 0.1
                  ).astype(np.float32))

    # middle nodes: Linear(adj[:, n].sum(), 1)
    for n in range(1, n_nodes - 1):
        in_n = int(adj[:, n].sum())
        w = np.asarray(jax.random.normal(keys[2 * n], (1, in_n), jnp.float32))
        raw_w.append((w * np.sqrt(2.0 / in_n)).astype(np.float32))
        raw_b.append((np.asarray(jax.random.normal(keys[2 * n + 1], (1,), jnp.float32)) * 0.1
                      ).astype(np.float32))

    # last node: Linear(adj[:, -1].sum(), output_dim)
    in_last = int(adj[:, n_nodes - 1].sum())
    w = np.asarray(jax.random.normal(keys[2 * (n_nodes - 1)], (output_dim, in_last), jnp.float32))
    raw_w.append((w * np.sqrt(2.0 / in_last)).astype(np.float32))
    raw_b.append((np.asarray(jax.random.normal(keys[2 * (n_nodes - 1) + 1], (output_dim,),
                                               jnp.float32)) * 0.1).astype(np.float32))

    # --- pack parameters + topology masks into one (rows, 128) slab ---
    slab = np.zeros((L.n_rows, P_LANES), np.float32)
    idx0 = np.nonzero(adj[0])[0]
    slab[0:input_dim, idx0] = raw_w[0].T                     # node-0 weights (zero-embedded)
    slab[L.b0_row, idx0] = raw_b[0]                          # node-0 bias
    slab[L.mask0_row, idx0] = 1.0                            # node-0 scatter mask

    for n in range(1, n_nodes - 1):
        idx = np.nonzero(adj[:, n])[0]
        slab[L.wc_row0 + idx, n] = raw_w[n][0]               # wmid column n
        slab[L.bc_row, n] = raw_b[n][0]                      # bmid
        slab[L.id_row0 + n, n] = 1.0                         # one-hot state-write row
    idx_last = np.nonzero(adj[:, n_nodes - 1])[0]
    slab[L.wc_row0 + idx_last, N:N + output_dim] = raw_w[-1].T   # wlast
    slab[L.bc_row, N:N + output_dim] = raw_b[-1]                 # blast
    slab[L.omask_row, N:N + output_dim] = 1.0                    # output-lane mask

    return jnp.asarray(slab), {"w": raw_w, "b": raw_b}


# ---------------------------------------------------------------------------
# Pure-numpy reference reproducing the torch forward() semantics exactly
# (boolean gather/scatter on the state vector, state=None path).
# ---------------------------------------------------------------------------
def reference_forward(x, adj, raw, nonlin_ids):
    x = np.asarray(x, np.float32)
    n_nodes = adj.shape[0]
    batch = x.shape[0]
    state = np.zeros((batch, n_nodes), np.float32)

    state[:, adj[0]] = _act(nonlin_ids[0], x @ raw["w"][0].T + raw["b"][0], xp=np)
    for n in range(1, n_nodes - 1):
        pre = state[:, adj[:, n]] @ raw["w"][n].T + raw["b"][n]
        state[:, n] = _act(nonlin_ids[n], pre, xp=np).squeeze()
    pre_out = state[:, adj[:, n_nodes - 1]] @ raw["w"][-1].T + raw["b"][-1]
    out = _act(nonlin_ids[n_nodes - 1], pre_out, xp=np)
    return out, state


# ---------------------------------------------------------------------------
if __name__ == "__main__":
    N_NODES, INPUT_DIM, OUTPUT_DIM, BATCH = 8, 16, 4, 64   # batch 64 -> tile 32, grid (2,)

    # Deterministic topology (strictly upper-triangular DAG), every node has inputs.
    rng = np.random.RandomState(0)
    adj = np.triu(rng.rand(N_NODES, N_NODES) < 0.4, k=1)
    adj[0, 1] = True
    for n in range(1, N_NODES):
        adj[n - 1, n] = True
    adj = adj.astype(bool)
    # Nodes are processed in index order by the module; the demo topology is a
    # strict DAG in that order (the (val - s_old) correction keeps the kernel
    # exact for any adjacency anyway).
    assert not np.tril(adj).any(), "adjacency must be strictly upper-triangular"

    # Per-node nonlinearity ids (exercise every entry of NONLINEARITY_MAP).
    nonlin_ids = [i % 7 for i in range(N_NODES)]

    key = jax.random.PRNGKey(0)
    k_x, k_p = jax.random.split(key)
    x = jax.random.normal(k_x, (BATCH, INPUT_DIM), jnp.float32)
    slab, raw = build_params(k_p, adj, INPUT_DIM, OUTPUT_DIM)

    out, state = progressive_rnn_forward(
        x, slab, n_nodes=N_NODES, input_dim=INPUT_DIM, output_dim=OUTPUT_DIM,
        nonlin_ids=nonlin_ids)
    jax.block_until_ready((out, state))

    ref_out, ref_state = reference_forward(np.asarray(x), adj, raw, nonlin_ids)
    # precision=HIGHEST restored -> tight tolerance.
    assert np.allclose(np.asarray(out), ref_out, rtol=1e-4, atol=1e-4), "out mismatch"
    assert np.allclose(np.asarray(state), ref_state, rtol=1e-4, atol=1e-4), "state mismatch"

    print("KERNEL_OK")
</pallas_src>

<mosaic_0001>
module attributes {stable_mosaic.version = 11 : i64} {
  func.func @kernel(%arg0: i32, %arg1: memref<32x128xf32, #tpu.memory_space<vmem>>, %arg2: memref<272x128xf32, #tpu.memory_space<vmem>>, %arg3: memref<32x128xf32, #tpu.memory_space<vmem>>) attributes {dimension_semantics = [#tpu.dimension_semantics<parallel>], iteration_bounds = array<i64: 2>, scalar_prefetch = 0 : i64, scratch_operands = 0 : i64, tpu.core_type = #tpu.core_type<tc>, window_params = [{transform_indices = @transform_0, window_bounds = array<i64: 32, 128>}, {pipeline_mode = #tpu.pipeline_mode<synchronous>, transform_indices = @transform_1, window_bounds = array<i64: 272, 128>}, {transform_indices = @transform_2, window_bounds = array<i64: 32, 128>}]} {
    %c0 = arith.constant 0 : index
    %c0_0 = arith.constant 0 : index
    %0 = vector.load %arg1[%c0, %c0_0] : memref<32x128xf32, #tpu.memory_space<vmem>>, vector<32x128xf32>
    %c0_1 = arith.constant 0 : index
    %c0_2 = arith.constant 0 : index
    %1 = vector.load %arg2[%c0_1, %c0_2] : memref<272x128xf32, #tpu.memory_space<vmem>>, vector<128x128xf32>
    %c128 = arith.constant 128 : index
    %c0_3 = arith.constant 0 : index
    %2 = vector.load %arg2[%c128, %c0_3] : memref<272x128xf32, #tpu.memory_space<vmem>>, vector<1x128xf32>
    %c129 = arith.constant 129 : index
    %c0_4 = arith.constant 0 : index
    %3 = vector.load %arg2[%c129, %c0_4] : memref<272x128xf32, #tpu.memory_space<vmem>>, vector<1x128xf32>
    %c130 = arith.constant 130 : index
    %c0_5 = arith.constant 0 : index
    %4 = vector.load %arg2[%c130, %c0_5] : memref<272x128xf32, #tpu.memory_space<vmem>>, vector<1x128xf32>
    %c131 = arith.constant 131 : index
    %c0_6 = arith.constant 0 : index
    %5 = vector.load %arg2[%c131, %c0_6] : memref<272x128xf32, #tpu.memory_space<vmem>>, vector<1x128xf32>
    %c136 = arith.constant 136 : index
    %c0_7 = arith.constant 0 : index
    %6 = vector.load %arg2[%c136, %c0_7] : memref<272x128xf32, #tpu.memory_space<vmem>>, vector<128x128xf32>
    %cst = arith.constant dense<0.000000e+00> : vector<32x128xf32>
    %7 = tpu.matmul %0, %1, %cst {dimension_numbers = #tpu.dot_dimension_numbers<[1], [0], [0], [1], [0, 0, 1, 1], [], []>, precision = #tpu.contract_precision<fp32>} : vector<32x128xf32>, vector<128x128xf32>, vector<32x128xf32> -> vector<32x128xf32>
    %8 = vector.broadcast %2 : vector<1x128xf32> to vector<32x128xf32>
    %9 = arith.addf %7, %8 : vector<32x128xf32>
    %cst_8 = arith.constant 0.000000e+00 : f32
    %10 = vector.broadcast %cst_8 : f32 to vector<32x128xf32>
    %11 = arith.maximumf %9, %10 : vector<32x128xf32>
    %12 = vector.broadcast %4 : vector<1x128xf32> to vector<32x128xf32>
    %13 = arith.mulf %11, %12 : vector<32x128xf32>
    %cst_9 = arith.constant dense<0.000000e+00> : vector<32x128xf32>
    %14 = tpu.matmul %13, %6, %cst_9 {dimension_numbers = #tpu.dot_dimension_numbers<[1], [0], [0], [1], [0, 0, 1, 1], [], []>, precision = #tpu.contract_precision<fp32>} : vector<32x128xf32>, vector<128x128xf32>, vector<32x128xf32> -> vector<32x128xf32>
    %15 = vector.broadcast %3 : vector<1x128xf32> to vector<32x128xf32>
    %16 = arith.addf %14, %15 : vector<32x128xf32>
    %17 = vector.extract_strided_slice %13 {offsets = [0, 1], sizes = [32, 1], strides = [1, 1]} : vector<32x128xf32> to vector<32x1xf32>
    %18 = vector.extract_strided_slice %16 {offsets = [0, 1], sizes = [32, 1], strides = [1, 1]} : vector<32x128xf32> to vector<32x1xf32>
    %19 = math.tanh %18 : vector<32x1xf32>
    %20 = arith.subf %19, %17 : vector<32x1xf32>
    %21 = vector.shape_cast %20 : vector<32x1xf32> to vector<32x1xf32>
    %22 = vector.broadcast %21 : vector<32x1xf32> to vector<32x128xf32>
    %c137 = arith.constant 137 : index
    %c0_10 = arith.constant 0 : index
    %23 = vector.load %arg2[%c137, %c0_10] : memref<272x128xf32, #tpu.memory_space<vmem>>, vector<1x128xf32>
    %c265 = arith.constant 265 : index
    %c0_11 = arith.constant 0 : index
    %24 = vector.load %arg2[%c265, %c0_11] : memref<272x128xf32, #tpu.memory_space<vmem>>, vector<1x128xf32>
    %25 = vector.broadcast %23 : vector<1x128xf32> to vector<32x128xf32>
    %26 = arith.mulf %22, %25 : vector<32x128xf32>
    %27 = arith.addf %16, %26 : vector<32x128xf32>
    %28 = vector.broadcast %24 : vector<1x128xf32> to vector<32x128xf32>
    %29 = arith.mulf %22, %28 : vector<32x128xf32>
    %30 = arith.addf %13, %29 : vector<32x128xf32>
    %31 = vector.extract_strided_slice %30 {offsets = [0, 2], sizes = [32, 1], strides = [1, 1]} : vector<32x128xf32> to vector<32x1xf32>
    %32 = vector.extract_strided_slice %27 {offsets = [0, 2], sizes = [32, 1], strides = [1, 1]} : vector<32x128xf32> to vector<32x1xf32>
    %cst_12 = arith.constant 0.000000e+00 : f32
    %33 = vector.broadcast %cst_12 : f32 to vector<32x1xf32>
    %34 = arith.cmpf oge, %32, %33 : vector<32x1xf32>
    %cst_13 = arith.constant 0.00999999977 : f32
    %35 = vector.broadcast %cst_13 : f32 to vector<32x1xf32>
    %36 = arith.mulf %35, %32 : vector<32x1xf32>
    %37 = arith.select %34, %32, %36 : vector<32x1xi1>, vector<32x1xf32>
    %38 = arith.subf %37, %31 : vector<32x1xf32>
    %39 = vector.shape_cast %38 : vector<32x1xf32> to vector<32x1xf32>
    %40 = vector.broadcast %39 : vector<32x1xf32> to vector<32x128xf32>
    %c138 = arith.constant 138 : index
    %c0_14 = arith.constant 0 : index
    %41 = vector.load %arg2[%c138, %c0_14] : memref<272x128xf32, #tpu.memory_space<vmem>>, vector<1x128xf32>
    %c266 = arith.constant 266 : index
    %c0_15 = arith.constant 0 : index
    %42 = vector.load %arg2[%c266, %c0_15] : memref<272x128xf32, #tpu.memory_space<vmem>>, vector<1x128xf32>
    %43 = vector.broadcast %41 : vector<1x128xf32> to vector<32x128xf32>
    %44 = arith.mulf %40, %43 : vector<32x128xf32>
    %45 = arith.addf %27, %44 : vector<32x128xf32>
    %46 = vector.broadcast %42 : vector<1x128xf32> to vector<32x128xf32>
    %47 = arith.mulf %40, %46 : vector<32x128xf32>
    %48 = arith.addf %30, %47 : vector<32x128xf32>
    %49 = vector.extract_strided_slice %48 {offsets = [0, 3], sizes = [32, 1], strides = [1, 1]} : vector<32x128xf32> to vector<32x1xf32>
    %50 = vector.extract_strided_slice %45 {offsets = [0, 3], sizes = [32, 1], strides = [1, 1]} : vector<32x128xf32> to vector<32x1xf32>
    %51 = arith.subf %50, %49 : vector<32x1xf32>
    %52 = vector.shape_cast %51 : vector<32x1xf32> to vector<32x1xf32>
    %53 = vector.broadcast %52 : vector<32x1xf32> to vector<32x128xf32>
    %c139 = arith.constant 139 : index
    %c0_16 = arith.constant 0 : index
    %54 = vector.load %arg2[%c139, %c0_16] : memref<272x128xf32, #tpu.memory_space<vmem>>, vector<1x128xf32>
    %c267 = arith.constant 267 : index
    %c0_17 = arith.constant 0 : index
    %55 = vector.load %arg2[%c267, %c0_17] : memref<272x128xf32, #tpu.memory_space<vmem>>, vector<1x128xf32>
    %56 = vector.broadcast %54 : vector<1x128xf32> to vector<32x128xf32>
    %57 = arith.mulf %53, %56 : vector<32x128xf32>
    %58 = arith.addf %45, %57 : vector<32x128xf32>
    %59 = vector.broadcast %55 : vector<1x128xf32> to vector<32x128xf32>
    %60 = arith.mulf %53, %59 : vector<32x128xf32>
    %61 = arith.addf %48, %60 : vector<32x128xf32>
    %62 = vector.extract_strided_slice %61 {offsets = [0, 4], sizes = [32, 1], strides = [1, 1]} : vector<32x128xf32> to vector<32x1xf32>
    %63 = vector.extract_strided_slice %58 {offsets = [0, 4], sizes = [32, 1], strides = [1, 1]} : vector<32x128xf32> to vector<32x1xf32>
    %64 = math.sin %63 : vector<32x1xf32>
    %65 = arith.subf %64, %62 : vector<32x1xf32>
    %66 = vector.shape_cast %65 : vector<32x1xf32> to vector<32x1xf32>
    %67 = vector.broadcast %66 : vector<32x1xf32> to vector<32x128xf32>
    %c140 = arith.constant 140 : index
    %c0_18 = arith.constant 0 : index
    %68 = vector.load %arg2[%c140, %c0_18] : memref<272x128xf32, #tpu.memory_space<vmem>>, vector<1x128xf32>
    %c268 = arith.constant 268 : index
    %c0_19 = arith.constant 0 : index
    %69 = vector.load %arg2[%c268, %c0_19] : memref<272x128xf32, #tpu.memory_space<vmem>>, vector<1x128xf32>
    %70 = vector.broadcast %68 : vector<1x128xf32> to vector<32x128xf32>
    %71 = arith.mulf %67, %70 : vector<32x128xf32>
    %72 = arith.addf %58, %71 : vector<32x128xf32>
    %73 = vector.broadcast %69 : vector<1x128xf32> to vector<32x128xf32>
    %74 = arith.mulf %67, %73 : vector<32x128xf32>
    %75 = arith.addf %61, %74 : vector<32x128xf32>
    %76 = vector.extract_strided_slice %75 {offsets = [0, 5], sizes = [32, 1], strides = [1, 1]} : vector<32x128xf32> to vector<32x1xf32>
    %77 = vector.extract_strided_slice %72 {offsets = [0, 5], sizes = [32, 1], strides = [1, 1]} : vector<32x128xf32> to vector<32x1xf32>
    %cst_20 = arith.constant 0.000000e+00 : f32
    %78 = vector.broadcast %cst_20 : f32 to vector<32x1xf32>
    %79 = arith.maximumf %77, %78 : vector<32x1xf32>
    %80 = math.absf %77 : vector<32x1xf32>
    %cst_21 = arith.constant 0.000000e+00 : f32
    %81 = vector.broadcast %cst_21 : f32 to vector<32x1xf32>
    %82 = arith.subf %81, %80 : vector<32x1xf32>
    %83 = math.exp %82 : vector<32x1xf32>
    %cst_22 = arith.constant 1.000000e+00 : f32
    %84 = vector.broadcast %cst_22 : f32 to vector<32x1xf32>
    %85 = arith.addf %84, %83 : vector<32x1xf32>
    %86 = math.log %85 : vector<32x1xf32>
    %87 = arith.addf %79, %86 : vector<32x1xf32>
    %88 = arith.subf %87, %76 : vector<32x1xf32>
    %89 = vector.shape_cast %88 : vector<32x1xf32> to vector<32x1xf32>
    %90 = vector.broadcast %89 : vector<32x1xf32> to vector<32x128xf32>
    %c141 = arith.constant 141 : index
    %c0_23 = arith.constant 0 : index
    %91 = vector.load %arg2[%c141, %c0_23] : memref<272x128xf32, #tpu.memory_space<vmem>>, vector<1x128xf32>
    %c269 = arith.constant 269 : index
    %c0_24 = arith.constant 0 : index
    %92 = vector.load %arg2[%c269, %c0_24] : memref<272x128xf32, #tpu.memory_space<vmem>>, vector<1x128xf32>
    %93 = vector.broadcast %91 : vector<1x128xf32> to vector<32x128xf32>
    %94 = arith.mulf %90, %93 : vector<32x128xf32>
    %95 = arith.addf %72, %94 : vector<32x128xf32>
    %96 = vector.broadcast %92 : vector<1x128xf32> to vector<32x128xf32>
    %97 = arith.mulf %90, %96 : vector<32x128xf32>
    %98 = arith.addf %75, %97 : vector<32x128xf32>
    %99 = vector.extract_strided_slice %98 {offsets = [0, 6], sizes = [32, 1], strides = [1, 1]} : vector<32x128xf32> to vector<32x1xf32>
    %100 = vector.extract_strided_slice %95 {offsets = [0, 6], sizes = [32, 1], strides = [1, 1]} : vector<32x128xf32> to vector<32x1xf32>
    %cst_25 = arith.constant 0.000000e+00 : f32
    %101 = vector.broadcast %cst_25 : f32 to vector<32x1xf32>
    %102 = arith.subf %101, %100 : vector<32x1xf32>
    %cst_26 = arith.constant 0.000000e+00 : f32
    %103 = vector.broadcast %cst_26 : f32 to vector<32x1xf32>
    %104 = arith.maximumf %102, %103 : vector<32x1xf32>
    %105 = math.absf %102 : vector<32x1xf32>
    %cst_27 = arith.constant 0.000000e+00 : f32
    %106 = vector.broadcast %cst_27 : f32 to vector<32x1xf32>
    %107 = arith.subf %106, %105 : vector<32x1xf32>
    %108 = math.exp %107 : vector<32x1xf32>
    %cst_28 = arith.constant 1.000000e+00 : f32
    %109 = vector.broadcast %cst_28 : f32 to vector<32x1xf32>
    %110 = arith.addf %109, %108 : vector<32x1xf32>
    %111 = math.log %110 : vector<32x1xf32>
    %112 = arith.addf %104, %111 : vector<32x1xf32>
    %cst_29 = arith.constant 0.000000e+00 : f32
    %113 = vector.broadcast %cst_29 : f32 to vector<32x1xf32>
    %114 = arith.subf %113, %112 : vector<32x1xf32>
    %115 = arith.subf %114, %99 : vector<32x1xf32>
    %116 = vector.shape_cast %115 : vector<32x1xf32> to vector<32x1xf32>
    %117 = vector.broadcast %116 : vector<32x1xf32> to vector<32x128xf32>
    %c142 = arith.constant 142 : index
    %c0_30 = arith.constant 0 : index
    %118 = vector.load %arg2[%c142, %c0_30] : memref<272x128xf32, #tpu.memory_space<vmem>>, vector<1x128xf32>
    %c270 = arith.constant 270 : index
    %c0_31 = arith.constant 0 : index
    %119 = vector.load %arg2[%c270, %c0_31] : memref<272x128xf32, #tpu.memory_space<vmem>>, vector<1x128xf32>
    %120 = vector.broadcast %118 : vector<1x128xf32> to vector<32x128xf32>
    %121 = arith.mulf %117, %120 : vector<32x128xf32>
    %122 = arith.addf %95, %121 : vector<32x128xf32>
    %123 = vector.broadcast %119 : vector<1x128xf32> to vector<32x128xf32>
    %124 = arith.mulf %117, %123 : vector<32x128xf32>
    %125 = arith.addf %98, %124 : vector<32x128xf32>
    %cst_32 = arith.constant 0.000000e+00 : f32
    %126 = vector.broadcast %cst_32 : f32 to vector<32x128xf32>
    %127 = arith.maximumf %122, %126 : vector<32x128xf32>
    %128 = vector.broadcast %5 : vector<1x128xf32> to vector<32x128xf32>
    %129 = arith.mulf %127, %128 : vector<32x128xf32>
    %130 = arith.addf %125, %129 : vector<32x128xf32>
    %c0_33 = arith.constant 0 : index
    %c0_34 = arith.constant 0 : index
    %131 = vector.load %arg3[%c0_33, %c0_34] : memref<32x128xf32, #tpu.memory_space<vmem>>, vector<32x128xf32>
    tpu.vector_store %arg3[%c0_33, %c0_34], %130 {strides = array<i32>} : memref<32x128xf32, #tpu.memory_space<vmem>>, vector<32x128xf32>,
    return
  }
  func.func @transform_0(%arg0: i32) -> (i32, i32) {
    %c0_i32 = arith.constant 0 : i32
    %c0_i32_0 = arith.constant 0 : i32
    return %arg0, %c0_i32 : i32, i32
  }
  func.func @transform_1(%arg0: i32) -> (i32, i32) {
    %c0_i32 = arith.constant 0 : i32
    %c0_i32_0 = arith.constant 0 : i32
    %c0_i32_1 = arith.constant 0 : i32
    return %c0_i32, %c0_i32_0 : i32, i32
  }
  func.func @transform_2(%arg0: i32) -> (i32, i32) {
    %c0_i32 = arith.constant 0 : i32
    %c0_i32_0 = arith.constant 0 : i32
    return %arg0, %c0_i32 : i32, i32
  }
}

</mosaic_0001>

<llo_original>
// kernel: tpu_custom_call.1
$region0: #{tpu_custom_call.1}
  #allocation0 [shape = 'u32[]', space=smem, size = 0x4, offset = 0x4, fixed_abs, tag = 'smem constant byte address 0x4 - core index']
  #allocation1 [shape = 'u32[144,128]{1,0:T(1,128)}', space=vmem, size = 0x12000, scoped, tag = 'internal scratch']
  %s0 = inlined_call_operand.hbm [shape: f32[64,128], index: 0, kind: input, shape index: {}]
  %s1 = inlined_call_operand.hbm [shape: f32[272,128], index: 1, kind: input, shape index: {}]
  %s2 = inlined_call_operand.hbm [shape: f32[64,128], index: 2, kind: output, shape index: {}]
  %s3 = sld [smem:[#allocation0]]
  $region49: #{tpu_custom_call.1} parent=0
    _
  %s5 = ssub.s32 1, %s3
  %s6 = scalar_select 0, %s5, %s3
  $region1: #{tpu_custom_call.1} parent=0
    #allocation2 [shape = 'u8[32768]{0}', space=vmem, size = 0x8000, scoped, tag = 'input window, operand 0']
    #allocation3 [shape = 's32[2]{0}', space=sflag, size = 0x8, scoped, tag = 'scoped memory for tpu_custom_call.1']
    #allocation4 [shape = 's32[2]{0}', space=sflag, size = 0x8, scoped, tag = 'scoped memory for tpu_custom_call.1']
    #allocation5 [shape = 'u8[139264]{0}', space=vmem, size = 0x22000, scoped, tag = 'input window, operand 1, single buffered']
    #allocation6 [shape = 's32[1]{0}', space=sflag, size = 0x4, scoped, tag = 'scoped memory for tpu_custom_call.1']
    #allocation7 [shape = 'u8[32768]{0}', space=vmem, size = 0x8000, scoped, tag = 'output window, operand 0']
    %7 = vsyncpa [#allocation3], 0
    %s8 = scalar_lea.sflag [#allocation3], 1
    %9 = vsyncpa %s8, 0
    %10 = vsyncpa [#allocation6], 0
    %11 = vsyncpa [#allocation4], 0
    %s12 = scalar_lea.sflag [#allocation4], 1
    %13 = vsyncpa %s12, 0
    loop: start=0, step=1, limit=4
    $region2: #{tpu_custom_call.1} parent=1 // loop_pre_header
      _
    $region3: #{tpu_custom_call.1} parent=1 // loop_header
      %s15 = sphi 0, %s19
      %p16 = scmp.ge.s32.totalorder %s15, 4
      %s25 = sphi 0, %s27
      %s28 = sphi 0, %s25
      %s29 = sphi 0, %s28
      %s45 = sphi 0, %s29
      %s49 = sphi 0, %s49
      %s51 = sphi 0, %s49
      %s52 = sphi 0, %s51
      %s66 = sphi 0, %s52
      %s72 = sphi 0, %s74
      %s75 = sphi 0, %s72
      %s76 = sphi 0, %s75
      %s92 = sphi 0, %s76
    $region4: #{tpu_custom_call.1} parent=1 // loop_header_branch
      %18 = sbr.rel (%p16) target = $region8
    $region5: #{tpu_custom_call.1} parent=1 // loop_body
      %s20 = ssub.s32 %s15, 1
      %s21 = ssub.s32 %s15, 2
      %s22 = sadd.s32 %s15, 1
      %s23 = ssub.s32 %s15, %s22
      %p24 = scmp.eq.s32.totalorder %s23, 0
      %s26 = sadd.s32 %s25, 1
      %s27 = scalar_select %p24, %s25, %s26
      %p30 = pneg %p24
      %p31 = scmp.eq.s32.totalorder %s15, 1
      %p32 = por %p30, %p31
      %p33 = scmp.ne.s32.totalorder %s25, %s28
      %p34 = scmp.eq.s32.totalorder %s15, 0
      %p35 = por %p33, %p34
      %p36 = scmp.ne.s32.totalorder %s25, %s28
      %p37 = scmp.eq.s32.totalorder %s20, 1
      %p38 = por %p36, %p37
      %p39 = scmp.ne.s32.totalorder %s28, %s29
      %p40 = scmp.eq.s32.totalorder %s20, 0
      %p41 = por %p39, %p40
      %p42 = scmp.ne.s32.totalorder %s28, %s29
      %p43 = scmp.eq.s32.totalorder %s21, 1
      %p44 = por %p42, %p43
      %p46 = scmp.ne.s32.totalorder %s29, %s45
      %p47 = scmp.eq.s32.totalorder %s21, 0
      %p48 = por %p46, %p47
      %s50 = sadd.s32 %s49, 1
      %p53 = scmp.eq.s32.totalorder %s15, 1
      %p54 = scmp.ne.s32.totalorder %s49, %s51
      %p55 = scmp.eq.s32.totalorder %s15, 0
      %p56 = por %p54, %p55
      %p57 = scmp.ne.s32.totalorder %s49, %s51
      %p58 = scmp.eq.s32.totalorder %s20, 1
      %p59 = por %p57, %p58
      %p60 = scmp.ne.s32.totalorder %s51, %s52
      %p61 = scmp.eq.s32.totalorder %s20, 0
      %p62 = por %p60, %p61
      %p63 = scmp.ne.s32.totalorder %s51, %s52
      %p64 = scmp.eq.s32.totalorder %s21, 1
      %p65 = por %p63, %p64
      %p67 = scmp.ne.s32.totalorder %s52, %s66
      %p68 = scmp.eq.s32.totalorder %s21, 0
      %p69 = por %p67, %p68
      %s70 = ssub.s32 %s15, %s22
      %p71 = scmp.eq.s32.totalorder %s70, 0
      %s73 = sadd.s32 %s72, 1
      %s74 = scalar_select %p71, %s72, %s73
      %p77 = pneg %p71
      %p78 = scmp.eq.s32.totalorder %s15, 1
      %p79 = por %p77, %p78
      %p80 = scmp.ne.s32.totalorder %s72, %s75
      %p81 = scmp.eq.s32.totalorder %s15, 0
      %p82 = por %p80, %p81
      %p83 = scmp.ne.s32.totalorder %s72, %s75
      %p84 = scmp.eq.s32.totalorder %s20, 1
      %p85 = por %p83, %p84
      %p86 = scmp.ne.s32.totalorder %s75, %s76
      %p87 = scmp.eq.s32.totalorder %s20, 0
      %p88 = por %p86, %p87
      %p89 = scmp.ne.s32.totalorder %s75, %s76
      %p90 = scmp.eq.s32.totalorder %s21, 1
      %p91 = por %p89, %p90
      %p93 = scmp.ne.s32.totalorder %s76, %s92
      %p94 = scmp.eq.s32.totalorder %s21, 0
      %p95 = por %p93, %p94
      %p96 = scmp.le.s32.totalorder 1, %s15
      %p97 = scmp.lt.s32.totalorder %s15, 3
      %p98 = pnand %p96, %p97
      %p99 = pneg %p98
      // Predicated region
      $region9: #{tpu_custom_call.1} parent=5 // pred_check
        _
      $region10: #{tpu_custom_call.1} parent=5 // pred_check_branch
        %101 = sbr.rel (%p98) target = $region12
      $region11: #{tpu_custom_call.1} parent=5 // pred_region
        %s102 = ssub.s32 %s15, 1
        // Predicated region
        $region13: #{tpu_custom_call.1} parent=11 // pred_check
          %p103 = pneg %p62
        $region14: #{tpu_custom_call.1} parent=11 // pred_check_branch
          %105 = sbr.rel (%p103) target = $region16
        $region15: #{tpu_custom_call.1} parent=11 // pred_region
          %s107 = ssub.s32 4352, 4352
          %108 = vsyncadd [#allocation6], %s107
          %s109 = sshll.u32 [#allocation5], 4
          %s110 = int_to_ptr.vmem [resolvable:$true] %s109
          %115 = dma.hbm_to_vmem [thread:$0]  %s1, 4352, %s110, [#allocation6], 128, 128, 8
        $region16: #{tpu_custom_call.1} parent=11 // pred_fallthru
          _
      $region12: #{tpu_custom_call.1} parent=5 // pred_fallthru
        _
      %p116 = scmp.lt.s32.totalorder %s15, 2
      // Predicated region
      $region17: #{tpu_custom_call.1} parent=5 // pred_check
        %p117 = pneg %p116
      $region18: #{tpu_custom_call.1} parent=5 // pred_check_branch
        %119 = sbr.rel (%p117) target = $region20
      $region19: #{tpu_custom_call.1} parent=5 // pred_region
        // Predicated region
        $region21: #{tpu_custom_call.1} parent=19 // pred_check
          %p120 = pneg %p35
        $region22: #{tpu_custom_call.1} parent=19 // pred_check_branch
          %122 = sbr.rel (%p120) target = $region24
        $region23: #{tpu_custom_call.1} parent=19 // pred_region
          %s123 = sand.u32 %s25, 1
          %s124 = scalar_lea.sflag [#allocation3], %s123
          %s125 = sand.u32 %s25, 1
          %s126 = smul.addr %s125, 32
          %s127 = scalar_lea.vmem [#allocation2], %s126
          %s128 = smul.u32 4, %s15
          %s130 = ssub.s32 512, 512
          %131 = vsyncadd %s124, %s130
          %s132 = smul.addr %s128, 128
          %s133 = scalar_lea.hbm %s0, %s132
          %s134 = sshll.u32 %s127, 4
          %s135 = int_to_ptr.vmem [resolvable:$true] %s134
          %140 = dma.hbm_to_vmem [thread:$0]  %s133, 512, %s135, %s124, 128, 128, 8
        $region24: #{tpu_custom_call.1} parent=19 // pred_fallthru
          _
      $region20: #{tpu_custom_call.1} parent=5 // pred_fallthru
        _
      %p141 = scmp.le.s32.totalorder 1, %s15
      %p142 = scmp.lt.s32.totalorder %s15, 3
      %p143 = pnand %p141, %p142
      %p144 = pneg %p143
      // Predicated region
      $region25: #{tpu_custom_call.1} parent=5 // pred_check
        _
      $region26: #{tpu_custom_call.1} parent=5 // pred_check_branch
        %146 = sbr.rel (%p143) target = $region28
      $region27: #{tpu_custom_call.1} parent=5 // pred_region
        %s147 = ssub.s32 %s15, 1
        %s148 = sand.u32 %s28, 1
        %s149 = scalar_lea.sflag [#allocation3], %s148
        %s150 = sand.u32 %s28, 1
        %s151 = smul.addr %s150, 32
        %s152 = scalar_lea.vmem [#allocation2], %s151
        // Predicated region
        $region29: #{tpu_custom_call.1} parent=27 // pred_check
          %p153 = pneg %p41
        $region30: #{tpu_custom_call.1} parent=27 // pred_check_branch
          %155 = sbr.rel (%p153) target = $region32
        $region31: #{tpu_custom_call.1} parent=27 // pred_region
          %156 = dma.done %s149, 512
        $region32: #{tpu_custom_call.1} parent=27 // pred_fallthru
          _
        // Predicated region
        $region33: #{tpu_custom_call.1} parent=27 // pred_check
          %p157 = pneg %p62
        $region34: #{tpu_custom_call.1} parent=27 // pred_check_branch
          %159 = sbr.rel (%p157) target = $region36
        $region35: #{tpu_custom_call.1} parent=27 // pred_region
          %160 = dma.done [#allocation6], 4352
        $region36: #{tpu_custom_call.1} parent=27 // pred_fallthru
          _
        %s161 = sand.u32 %s28, 1
        %s162 = scalar_lea.sflag [#allocation3], %s161
        %s163 = sand.u32 %s28, 1
        %s164 = smul.addr %s163, 32
        %s165 = scalar_lea.vmem [#allocation2], %s164
        %p166 = pneg %p41
        %p167 = pneg %p38
        %p168 = pneg %p62
        %p169 = pneg %p59
        %p170 = pneg %p88
        %p171 = pneg %p85
        %s172 = sand.u32 %s75, 1
        %s173 = scalar_lea.sflag [#allocation4], %s172
        %s174 = sand.u32 %s75, 1
        %s175 = smul.addr %s174, 32
        %s176 = scalar_lea.vmem [#allocation7], %s175
        %s177 = smul.u32 4, %s20
        %s178 = smul.u32 4, %s20
        %v179 = vld [vmem:[%s152] sm:$0xff]
        %v180 = vld [vmem:[%s152 + $0x8] sm:$0xff]
        %v181 = vld [vmem:[%s152 + $0x10] sm:$0xff]
        %v182 = vld [vmem:[%s152 + $0x18] sm:$0xff]
        %v183 = vld [vmem:[#allocation5] sm:$0xff]
        %v184 = vld [vmem:[#allocation5 + $0x8] sm:$0xff]
        %v185 = vld [vmem:[#allocation5 + $0x10] sm:$0xff]
        %v186 = vld [vmem:[#allocation5 + $0x18] sm:$0xff]
        %v187 = vld [vmem:[#allocation5 + $0x20] sm:$0xff]
        %v188 = vld [vmem:[#allocation5 + $0x28] sm:$0xff]
        %v189 = vld [vmem:[#allocation5 + $0x30] sm:$0xff]
        %v190 = vld [vmem:[#allocation5 + $0x38] sm:$0xff]
        %v191 = vld [vmem:[#allocation5 + $0x40] sm:$0xff]
        %v192 = vld [vmem:[#allocation5 + $0x48] sm:$0xff]
        %v193 = vld [vmem:[#allocation5 + $0x50] sm:$0xff]
        %v194 = vld [vmem:[#allocation5 + $0x58] sm:$0xff]
        %v195 = vld [vmem:[#allocation5 + $0x60] sm:$0xff]
        %v196 = vld [vmem:[#allocation5 + $0x68] sm:$0xff]
        %v197 = vld [vmem:[#allocation5 + $0x70] sm:$0xff]
        %v198 = vld [vmem:[#allocation5 + $0x78] sm:$0xff]
        %v199 = vld [vmem:[#allocation5 + $0x80] sm:$0x1]
        %v200 = vld [vmem:[#allocation5 + $0x81] sm:$0x1]
        %v201 = vld [vmem:[#allocation5 + $0x82] sm:$0x1]
        %v202 = vld [vmem:[#allocation5 + $0x83] sm:$0x1]
        %v203 = vld [vmem:[#allocation5 + $0x88] sm:$0xff]
        %v204 = vld [vmem:[#allocation5 + $0x90] sm:$0xff]
        %v205 = vld [vmem:[#allocation5 + $0x98] sm:$0xff]
        %v206 = vld [vmem:[#allocation5 + $0xa0] sm:$0xff]
        %v207 = vld [vmem:[#allocation5 + $0xa8] sm:$0xff]
        %v208 = vld [vmem:[#allocation5 + $0xb0] sm:$0xff]
        %v209 = vld [vmem:[#allocation5 + $0xb8] sm:$0xff]
        %v210 = vld [vmem:[#allocation5 + $0xc0] sm:$0xff]
        %v211 = vld [vmem:[#allocation5 + $0xc8] sm:$0xff]
        %v212 = vld [vmem:[#allocation5 + $0xd0] sm:$0xff]
        %v213 = vld [vmem:[#allocation5 + $0xd8] sm:$0xff]
        %v214 = vld [vmem:[#allocation5 + $0xe0] sm:$0xff]
        %v215 = vld [vmem:[#allocation5 + $0xe8] sm:$0xff]
        %v216 = vld [vmem:[#allocation5 + $0xf0] sm:$0xff]
        %v217 = vld [vmem:[#allocation5 + $0xf8] sm:$0xff]
        %v218 = vld [vmem:[#allocation5 + $0x100] sm:$0xff]
        %v219 = vlaneseq
        %v220 = vshrl.u32 %v219, 7
        %v221 = vsub.s32 0, %v220
        %v222 = vrot.slane %v199, %v221
        %223 = vmatprep.subr.mxu0 0.0
        %v224 = vand.u32 %v183, 4294901760
        %225 = vmatpush1.msra.mxu0 %v224
        %226 = vmatprep.subr.mxu0 0.0
        %v227 = vand.u32 %v184, 4294901760
        %228 = vmatpush1.msra.mxu0 %v227
        %229 = vmatprep.subr.mxu0 0.0
        %v230 = vand.u32 %v185, 4294901760
        %231 = vmatpush1.msra.mxu0 %v230
        %232 = vmatprep.subr.mxu0 0.0
        %v233 = vand.u32 %v186, 4294901760
        %234 = vmatpush1.msra.mxu0 %v233
        %235 = vmatprep.subr.mxu0 0.0
        %v236 = vand.u32 %v187, 4294901760
        %237 = vmatpush1.msra.mxu0 %v236
        %238 = vmatprep.subr.mxu0 0.0
        %v239 = vand.u32 %v188, 4294901760
        %240 = vmatpush1.msra.mxu0 %v239
        %241 = vmatprep.subr.mxu0 0.0
        %v242 = vand.u32 %v189, 4294901760
        %243 = vmatpush1.msra.mxu0 %v242
        %244 = vmatprep.subr.mxu0 0.0
        %v245 = vand.u32 %v190, 4294901760
        %246 = vmatpush1.msra.mxu0 %v245
        %247 = vmatprep.subr.mxu0 0.0
        %v248 = vand.u32 %v191, 4294901760
        %249 = vmatpush1.msra.mxu0 %v248
        %250 = vmatprep.subr.mxu0 0.0
        %v251 = vand.u32 %v192, 4294901760
        %252 = vmatpush1.msra.mxu0 %v251
        %253 = vmatprep.subr.mxu0 0.0
        %v254 = vand.u32 %v193, 4294901760
        %255 = vmatpush1.msra.mxu0 %v254
        %256 = vmatprep.subr.mxu0 0.0
        %v257 = vand.u32 %v194, 4294901760
        %258 = vmatpush1.msra.mxu0 %v257
        %259 = vmatprep.subr.mxu0 0.0
        %v260 = vand.u32 %v195, 4294901760
        %261 = vmatpush1.msra.mxu0 %v260
        %262 = vmatprep.subr.mxu0 0.0
        %v263 = vand.u32 %v196, 4294901760
        %264 = vmatpush1.msra.mxu0 %v263
        %265 = vmatprep.subr.mxu0 0.0
        %v266 = vand.u32 %v197, 4294901760
        %267 = vmatpush1.msra.mxu0 %v266
        %268 = vmatprep.subr.mxu0 0.0
        %v269 = vand.u32 %v198, 4294901760
        %270 = vmatpush1.msra.mxu0 %v269
        %271 = vmatprep.subr.mxu0 0.0
        %272 = vmatpush1.msra.mxu0 0.0
        %273 = vmatprep.subr.mxu0 0.0
        %274 = vmatpush1.msra.mxu0 0.0
        %275 = vmatprep.subr.mxu0 0.0
        %276 = vmatpush1.msra.mxu0 0.0
        %277 = vmatprep.subr.mxu0 0.0
        %278 = vmatpush1.msra.mxu0 0.0
        %279 = vmatprep.subr.mxu0 0.0
        %280 = vmatpush1.msra.mxu0 0.0
        %281 = vmatprep.subr.mxu0 0.0
        %282 = vmatpush1.msra.mxu0 0.0
        %283 = vmatprep.subr.mxu0 0.0
        %284 = vmatpush1.msra.mxu0 0.0
        %285 = vmatprep.subr.mxu0 0.0
        %286 = vmatpush1.msra.mxu0 0.0
        %287 = vmatprep.subr.mxu0 0.0
        %288 = vmatpush1.msra.mxu0 0.0
        %289 = vmatprep.subr.mxu0 0.0
        %290 = vmatpush1.msra.mxu0 0.0
        %291 = vmatprep.subr.mxu0 0.0
        %292 = vmatpush1.msra.mxu0 0.0
        %293 = vmatprep.subr.mxu0 0.0
        %294 = vmatpush1.msra.mxu0 0.0
        %295 = vmatprep.subr.mxu0 0.0
        %296 = vmatpush1.msra.mxu0 0.0
        %297 = vmatprep.subr.mxu0 0.0
        %298 = vmatpush1.msra.mxu0 0.0
        %299 = vmatprep.subr.mxu0 0.0
        %300 = vmatpush1.msra.mxu0 0.0
        %301 = vmatprep.subr.mxu0 0.0
        %302 = vmatpush1.msra.mxu0 0.0
        %303 = vmatprep.mubr.f32.mxu0 0.0
        %v304 = vand.u32 %v179, 4294901760
        %v305 = vsub.f32 %v179, %v304
        %v306 = vand.u32 %v305, 4294901760
        %v307 = vsub.f32 %v305, %v306
        %v308 = vand.u32 %v307, 4294901760
        %309 = vmatmul.mubr.f32.gmra.mrb[0].mxu0 %v308
        %v310 = vpop.f32.mrb[0].mxu0
        %v311 = vadd.f32 %v222, %v310
        %v312 = vpop.f32.mrb[0].mxu0
        %313 = vmatprep.mubr.f32.mxu0 0.0
        %v314 = vand.u32 %v180, 4294901760
        %v315 = vsub.f32 %v180, %v314
        %v316 = vand.u32 %v315, 4294901760
        %v317 = vsub.f32 %v315, %v316
        %v318 = vand.u32 %v317, 4294901760
        %319 = vmatmul.mubr.f32.gmra.mrb[0].mxu0 %v318
        %v320 = vpop.f32.mrb[0].mxu0
        %v321 = vadd.f32 %v222, %v320
        %v322 = vpop.f32.mrb[0].mxu0
        %323 = vmatprep.mubr.f32.mxu0 0.0
        %v324 = vand.u32 %v181, 4294901760
        %v325 = vsub.f32 %v181, %v324
        %v326 = vand.u32 %v325, 4294901760
        %v327 = vsub.f32 %v325, %v326
        %v328 = vand.u32 %v327, 4294901760
        %329 = vmatmul.mubr.f32.gmra.mrb[0].mxu0 %v328
        %v330 = vpop.f32.mrb[0].mxu0
        %v331 = vadd.f32 %v222, %v330
        %v332 = vpop.f32.mrb[0].mxu0
        %333 = vmatprep.mubr.f32.mxu0 0.0
        %v334 = vand.u32 %v182, 4294901760
        %v335 = vsub.f32 %v182, %v334
        %v336 = vand.u32 %v335, 4294901760
        %v337 = vsub.f32 %v335, %v336
        %v338 = vand.u32 %v337, 4294901760
        %339 = vmatmul.mubr.f32.gmra.mrb[0].mxu0 %v338
        %v340 = vpop.f32.mrb[0].mxu0
        %v341 = vadd.f32 %v222, %v340
        %v342 = vpop.f32.mrb[0].mxu0
        %343 = vdwg.mxu0
        %344 = vmatprep.subr.mxu0 0.0
        %v345 = vand.u32 %v183, 4294901760
        %v346 = vsub.f32 %v183, %v345
        %v347 = vand.u32 %v346, 4294901760
        %v348 = vsub.f32 %v346, %v347
        %v349 = vand.u32 %v348, 4294901760
        %350 = vmatpush1.msra.mxu0 %v349
        %351 = vmatprep.subr.mxu0 0.0
        %v352 = vand.u32 %v184, 4294901760
        %v353 = vsub.f32 %v184, %v352
        %v354 = vand.u32 %v353, 4294901760
        %v355 = vsub.f32 %v353, %v354
        %v356 = vand.u32 %v355, 4294901760
        %357 = vmatpush1.msra.mxu0 %v356
        %358 = vmatprep.subr.mxu0 0.0
        %v359 = vand.u32 %v185, 4294901760
        %v360 = vsub.f32 %v185, %v359
        %v361 = vand.u32 %v360, 4294901760
        %v362 = vsub.f32 %v360, %v361
        %v363 = vand.u32 %v362, 4294901760
        %364 = vmatpush1.msra.mxu0 %v363
        %365 = vmatprep.subr.mxu0 0.0
        %v366 = vand.u32 %v186, 4294901760
        %v367 = vsub.f32 %v186, %v366
        %v368 = vand.u32 %v367, 4294901760
        %v369 = vsub.f32 %v367, %v368
        %v370 = vand.u32 %v369, 4294901760
        %371 = vmatpush1.msra.mxu0 %v370
        %372 = vmatprep.subr.mxu0 0.0
        %v373 = vand.u32 %v187, 4294901760
        %v374 = vsub.f32 %v187, %v373
        %v375 = vand.u32 %v374, 4294901760
        %v376 = vsub.f32 %v374, %v375
        %v377 = vand.u32 %v376, 4294901760
        %378 = vmatpush1.msra.mxu0 %v377
        %379 = vmatprep.subr.mxu0 0.0
        %v380 = vand.u32 %v188, 4294901760
        %v381 = vsub.f32 %v188, %v380
        %v382 = vand.u32 %v381, 4294901760
        %v383 = vsub.f32 %v381, %v382
        %v384 = vand.u32 %v383, 4294901760
        %385 = vmatpush1.msra.mxu0 %v384
        %386 = vmatprep.subr.mxu0 0.0
        %v387 = vand.u32 %v189, 4294901760
        %v388 = vsub.f32 %v189, %v387
        %v389 = vand.u32 %v388, 4294901760
        %v390 = vsub.f32 %v388, %v389
        %v391 = vand.u32 %v390, 4294901760
        %392 = vmatpush1.msra.mxu0 %v391
        %393 = vmatprep.subr.mxu0 0.0
        %v394 = vand.u32 %v190, 4294901760
        %v395 = vsub.f32 %v190, %v394
        %v396 = vand.u32 %v395, 4294901760
        %v397 = vsub.f32 %v395, %v396
        %v398 = vand.u32 %v397, 4294901760
        %399 = vmatpush1.msra.mxu0 %v398
        %400 = vmatprep.subr.mxu0 0.0
        %v401 = vand.u32 %v191, 4294901760
        %v402 = vsub.f32 %v191, %v401
        %v403 = vand.u32 %v402, 4294901760
        %v404 = vsub.f32 %v402, %v403
        %v405 = vand.u32 %v404, 4294901760
        %406 = vmatpush1.msra.mxu0 %v405
        %407 = vmatprep.subr.mxu0 0.0
        %v408 = vand.u32 %v192, 4294901760
        %v409 = vsub.f32 %v192, %v408
        %v410 = vand.u32 %v409, 4294901760
        %v411 = vsub.f32 %v409, %v410
        %v412 = vand.u32 %v411, 4294901760
        %413 = vmatpush1.msra.mxu0 %v412
        %414 = vmatprep.subr.mxu0 0.0
        %v415 = vand.u32 %v193, 4294901760
        %v416 = vsub.f32 %v193, %v415
        %v417 = vand.u32 %v416, 4294901760
        %v418 = vsub.f32 %v416, %v417
        %v419 = vand.u32 %v418, 4294901760
        %420 = vmatpush1.msra.mxu0 %v419
        %421 = vmatprep.subr.mxu0 0.0
        %v422 = vand.u32 %v194, 4294901760
        %v423 = vsub.f32 %v194, %v422
        %v424 = vand.u32 %v423, 4294901760
        %v425 = vsub.f32 %v423, %v424
        %v426 = vand.u32 %v425, 4294901760
        %427 = vmatpush1.msra.mxu0 %v426
        %428 = vmatprep.subr.mxu0 0.0
        %v429 = vand.u32 %v195, 4294901760
        %v430 = vsub.f32 %v195, %v429
        %v431 = vand.u32 %v430, 4294901760
        %v432 = vsub.f32 %v430, %v431
        %v433 = vand.u32 %v432, 4294901760
        %434 = vmatpush1.msra.mxu0 %v433
        %435 = vmatprep.subr.mxu0 0.0
        %v436 = vand.u32 %v196, 4294901760
        %v437 = vsub.f32 %v196, %v436
        %v438 = vand.u32 %v437, 4294901760
        %v439 = vsub.f32 %v437, %v438
        %v440 = vand.u32 %v439, 4294901760
        %441 = vmatpush1.msra.mxu0 %v440
        %442 = vmatprep.subr.mxu0 0.0
        %v443 = vand.u32 %v197, 4294901760
        %v444 = vsub.f32 %v197, %v443
        %v445 = vand.u32 %v444, 4294901760
        %v446 = vsub.f32 %v444, %v445
        %v447 = vand.u32 %v446, 4294901760
        %448 = vmatpush1.msra.mxu0 %v447
        %449 = vmatprep.subr.mxu0 0.0
        %v450 = vand.u32 %v198, 4294901760
        %v451 = vsub.f32 %v198, %v450
        %v452 = vand.u32 %v451, 4294901760
        %v453 = vsub.f32 %v451, %v452
        %v454 = vand.u32 %v453, 4294901760
        %455 = vmatpush1.msra.mxu0 %v454
        %456 = vmatprep.subr.mxu0 0.0
        %457 = vmatpush1.msra.mxu0 0.0
        %458 = vmatprep.subr.mxu0 0.0
        %459 = vmatpush1.msra.mxu0 0.0
        %460 = vmatprep.subr.mxu0 0.0
        %461 = vmatpush1.msra.mxu0 0.0
        %462 = vmatprep.subr.mxu0 0.0
        %463 = vmatpush1.msra.mxu0 0.0
        %464 = vmatprep.subr.mxu0 0.0
        %465 = vmatpush1.msra.mxu0 0.0
        %466 = vmatprep.subr.mxu0 0.0
        %467 = vmatpush1.msra.mxu0 0.0
        %468 = vmatprep.subr.mxu0 0.0
        %469 = vmatpush1.msra.mxu0 0.0
        %470 = vmatprep.subr.mxu0 0.0
        %471 = vmatpush1.msra.mxu0 0.0
        %472 = vmatprep.subr.mxu0 0.0
        %473 = vmatpush1.msra.mxu0 0.0
        %474 = vmatprep.subr.mxu0 0.0
        %475 = vmatpush1.msra.mxu0 0.0
        %476 = vmatprep.subr.mxu0 0.0
        %477 = vmatpush1.msra.mxu0 0.0
        %478 = vmatprep.subr.mxu0 0.0
        %479 = vmatpush1.msra.mxu0 0.0
        %480 = vmatprep.subr.mxu0 0.0
        %481 = vmatpush1.msra.mxu0 0.0
        %482 = vmatprep.subr.mxu0 0.0
        %483 = vmatpush1.msra.mxu0 0.0
        %484 = vmatprep.subr.mxu0 0.0
        %485 = vmatpush1.msra.mxu0 0.0
        %486 = vmatprep.subr.mxu0 0.0
        %487 = vmatpush1.msra.mxu0 0.0
        %488 = vmatprep.mubr.f32.mxu0 0.0
        %v489 = vand.u32 %v179, 4294901760
        %490 = vmatmul.mubr.f32.gmra.mrb[0].mxu0 %v489
        %v491 = vpop.f32.mrb[0].mxu0
        %v492 = vadd.f32 %v311, %v491
        %v493 = vpop.f32.mrb[0].mxu0
        %494 = vmatprep.mubr.f32.mxu0 0.0
        %v495 = vand.u32 %v180, 4294901760
        %496 = vmatmul.mubr.f32.gmra.mrb[0].mxu0 %v495
        %v497 = vpop.f32.mrb[0].mxu0
        %v498 = vadd.f32 %v321, %v497
        %v499 = vpop.f32.mrb[0].mxu0
        %500 = vmatprep.mubr.f32.mxu0 0.0
        %v501 = vand.u32 %v181, 4294901760
        %502 = vmatmul.mubr.f32.gmra.mrb[0].mxu0 %v501
        %v503 = vpop.f32.mrb[0].mxu0
        %v504 = vadd.f32 %v331, %v503
        %v505 = vpop.f32.mrb[0].mxu0
        %506 = vmatprep.mubr.f32.mxu0 0.0
        %v507 = vand.u32 %v182, 4294901760
        %508 = vmatmul.mubr.f32.gmra.mrb[0].mxu0 %v507
        %v509 = vpop.f32.mrb[0].mxu0
        %v510 = vadd.f32 %v341, %v509
        %v511 = vpop.f32.mrb[0].mxu0
        %512 = vdwg.mxu0
        %513 = vmatprep.subr.mxu0 0.0
        %v514 = vand.u32 %v183, 4294901760
        %v515 = vsub.f32 %v183, %v514
        %516 = vmatpush1.msra.mxu0 %v515
        %517 = vmatprep.subr.mxu0 0.0
        %v518 = vand.u32 %v184, 4294901760
        %v519 = vsub.f32 %v184, %v518
        %520 = vmatpush1.msra.mxu0 %v519
        %521 = vmatprep.subr.mxu0 0.0
        %v522 = vand.u32 %v185, 4294901760
        %v523 = vsub.f32 %v185, %v522
        %524 = vmatpush1.msra.mxu0 %v523
        %525 = vmatprep.subr.mxu0 0.0
        %v526 = vand.u32 %v186, 4294901760
        %v527 = vsub.f32 %v186, %v526
        %528 = vmatpush1.msra.mxu0 %v527
        %529 = vmatprep.subr.mxu0 0.0
        %v530 = vand.u32 %v187, 4294901760
        %v531 = vsub.f32 %v187, %v530
        %532 = vmatpush1.msra.mxu0 %v531
        %533 = vmatprep.subr.mxu0 0.0
        %v534 = vand.u32 %v188, 4294901760
        %v535 = vsub.f32 %v188, %v534
        %536 = vmatpush1.msra.mxu0 %v535
        %537 = vmatprep.subr.mxu0 0.0
        %v538 = vand.u32 %v189, 4294901760
        %v539 = vsub.f32 %v189, %v538
        %540 = vmatpush1.msra.mxu0 %v539
        %541 = vmatprep.subr.mxu0 0.0
        %v542 = vand.u32 %v190, 4294901760
        %v543 = vsub.f32 %v190, %v542
        %544 = vmatpush1.msra.mxu0 %v543
        %545 = vmatprep.subr.mxu0 0.0
        %v546 = vand.u32 %v191, 4294901760
        %v547 = vsub.f32 %v191, %v546
        %548 = vmatpush1.msra.mxu0 %v547
        %549 = vmatprep.subr.mxu0 0.0
        %v550 = vand.u32 %v192, 4294901760
        %v551 = vsub.f32 %v192, %v550
        %552 = vmatpush1.msra.mxu0 %v551
        %553 = vmatprep.subr.mxu0 0.0
        %v554 = vand.u32 %v193, 4294901760
        %v555 = vsub.f32 %v193, %v554
        %556 = vmatpush1.msra.mxu0 %v555
        %557 = vmatprep.subr.mxu0 0.0
        %v558 = vand.u32 %v194, 4294901760
        %v559 = vsub.f32 %v194, %v558
        %560 = vmatpush1.msra.mxu0 %v559
        %561 = vmatprep.subr.mxu0 0.0
        %v562 = vand.u32 %v195, 4294901760
        %v563 = vsub.f32 %v195, %v562
        %564 = vmatpush1.msra.mxu0 %v563
        %565 = vmatprep.subr.mxu0 0.0
        %v566 = vand.u32 %v196, 4294901760
        %v567 = vsub.f32 %v196, %v566
        %568 = vmatpush1.msra.mxu0 %v567
        %569 = vmatprep.subr.mxu0 0.0
        %v570 = vand.u32 %v197, 4294901760
        %v571 = vsub.f32 %v197, %v570
        %572 = vmatpush1.msra.mxu0 %v571
        %573 = vmatprep.subr.mxu0 0.0
        %v574 = vand.u32 %v198, 4294901760
        %v575 = vsub.f32 %v198, %v574
        %576 = vmatpush1.msra.mxu0 %v575
        %577 = vmatprep.subr.mxu0 0.0
        %578 = vmatpush1.msra.mxu0 0.0
        %579 = vmatprep.subr.mxu0 0.0
        %580 = vmatpush1.msra.mxu0 0.0
        %581 = vmatprep.subr.mxu0 0.0
        %582 = vmatpush1.msra.mxu0 0.0
        %583 = vmatprep.subr.mxu0 0.0
        %584 = vmatpush1.msra.mxu0 0.0
        %585 = vmatprep.subr.mxu0 0.0
        %586 = vmatpush1.msra.mxu0 0.0
        %587 = vmatprep.subr.mxu0 0.0
        %588 = vmatpush1.msra.mxu0 0.0
        %589 = vmatprep.subr.mxu0 0.0
        %590 = vmatpush1.msra.mxu0 0.0
        %591 = vmatprep.subr.mxu0 0.0
        %592 = vmatpush1.msra.mxu0 0.0
        %593 = vmatprep.subr.mxu0 0.0
        %594 = vmatpush1.msra.mxu0 0.0
        %595 = vmatprep.subr.mxu0 0.0
        %596 = vmatpush1.msra.mxu0 0.0
        %597 = vmatprep.subr.mxu0 0.0
        %598 = vmatpush1.msra.mxu0 0.0
        %599 = vmatprep.subr.mxu0 0.0
        %600 = vmatpush1.msra.mxu0 0.0
        %601 = vmatprep.subr.mxu0 0.0
        %602 = vmatpush1.msra.mxu0 0.0
        %603 = vmatprep.subr.mxu0 0.0
        %604 = vmatpush1.msra.mxu0 0.0
        %605 = vmatprep.subr.mxu0 0.0
        %606 = vmatpush1.msra.mxu0 0.0
        %607 = vmatprep.subr.mxu0 0.0
        %608 = vmatpush1.msra.mxu0 0.0
        %609 = vmatprep.mubr.f32.mxu0 0.0
        %v610 = vand.u32 %v179, 4294901760
        %v611 = vsub.f32 %v179, %v610
        %612 = vmatmul.mubr.f32.gmra.mrb[0].mxu0 %v611
        %v613 = vpop.f32.mrb[0].mxu0
        %v614 = vadd.f32 %v492, %v613
        %v615 = vpop.f32.mrb[0].mxu0
        %616 = vmatprep.mubr.f32.mxu0 0.0
        %v617 = vand.u32 %v180, 4294901760
        %v618 = vsub.f32 %v180, %v617
        %619 = vmatmul.mubr.f32.gmra.mrb[0].mxu0 %v618
        %v620 = vpop.f32.mrb[0].mxu0
        %v621 = vadd.f32 %v498, %v620
        %v622 = vpop.f32.mrb[0].mxu0
        %623 = vmatprep.mubr.f32.mxu0 0.0
        %v624 = vand.u32 %v181, 4294901760
        %v625 = vsub.f32 %v181, %v624
        %626 = vmatmul.mubr.f32.gmra.mrb[0].mxu0 %v625
        %v627 = vpop.f32.mrb[0].mxu0
        %v628 = vadd.f32 %v504, %v627
        %v629 = vpop.f32.mrb[0].mxu0
        %630 = vmatprep.mubr.f32.mxu0 0.0
        %v631 = vand.u32 %v182, 4294901760
        %v632 = vsub.f32 %v182, %v631
        %633 = vmatmul.mubr.f32.gmra.mrb[0].mxu0 %v632
        %v634 = vpop.f32.mrb[0].mxu0
        %v635 = vadd.f32 %v510, %v634
        %v636 = vpop.f32.mrb[0].mxu0
        %637 = vdwg.mxu0
        %638 = vmatprep.subr.mxu0 0.0
        %v639 = vand.u32 %v183, 4294901760
        %640 = vmatpush1.msra.mxu0 %v639
        %641 = vmatprep.subr.mxu0 0.0
        %v642 = vand.u32 %v184, 4294901760
        %643 = vmatpush1.msra.mxu0 %v642
        %644 = vmatprep.subr.mxu0 0.0
        %v645 = vand.u32 %v185, 4294901760
        %646 = vmatpush1.msra.mxu0 %v645
        %647 = vmatprep.subr.mxu0 0.0
        %v648 = vand.u32 %v186, 4294901760
        %649 = vmatpush1.msra.mxu0 %v648
        %650 = vmatprep.subr.mxu0 0.0
        %v651 = vand.u32 %v187, 4294901760
        %652 = vmatpush1.msra.mxu0 %v651
        %653 = vmatprep.subr.mxu0 0.0
        %v654 = vand.u32 %v188, 4294901760
        %655 = vmatpush1.msra.mxu0 %v654
        %656 = vmatprep.subr.mxu0 0.0
        %v657 = vand.u32 %v189, 4294901760
        %658 = vmatpush1.msra.mxu0 %v657
        %659 = vmatprep.subr.mxu0 0.0
        %v660 = vand.u32 %v190, 4294901760
        %661 = vmatpush1.msra.mxu0 %v660
        %662 = vmatprep.subr.mxu0 0.0
        %v663 = vand.u32 %v191, 4294901760
        %664 = vmatpush1.msra.mxu0 %v663
        %665 = vmatprep.subr.mxu0 0.0
        %v666 = vand.u32 %v192, 4294901760
        %667 = vmatpush1.msra.mxu0 %v666
        %668 = vmatprep.subr.mxu0 0.0
        %v669 = vand.u32 %v193, 4294901760
        %670 = vmatpush1.msra.mxu0 %v669
        %671 = vmatprep.subr.mxu0 0.0
        %v672 = vand.u32 %v194, 4294901760
        %673 = vmatpush1.msra.mxu0 %v672
        %674 = vmatprep.subr.mxu0 0.0
        %v675 = vand.u32 %v195, 4294901760
        %676 = vmatpush1.msra.mxu0 %v675
        %677 = vmatprep.subr.mxu0 0.0
        %v678 = vand.u32 %v196, 4294901760
        %679 = vmatpush1.msra.mxu0 %v678
        %680 = vmatprep.subr.mxu0 0.0
        %v681 = vand.u32 %v197, 4294901760
        %682 = vmatpush1.msra.mxu0 %v681
        %683 = vmatprep.subr.mxu0 0.0
        %v684 = vand.u32 %v198, 4294901760
        %685 = vmatpush1.msra.mxu0 %v684
        %686 = vmatprep.subr.mxu0 0.0
        %687 = vmatpush1.msra.mxu0 0.0
        %688 = vmatprep.subr.mxu0 0.0
        %689 = vmatpush1.msra.mxu0 0.0
        %690 = vmatprep.subr.mxu0 0.0
        %691 = vmatpush1.msra.mxu0 0.0
        %692 = vmatprep.subr.mxu0 0.0
        %693 = vmatpush1.msra.mxu0 0.0
        %694 = vmatprep.subr.mxu0 0.0
        %695 = vmatpush1.msra.mxu0 0.0
        %696 = vmatprep.subr.mxu0 0.0
        %697 = vmatpush1.msra.mxu0 0.0
        %698 = vmatprep.subr.mxu0 0.0
        %699 = vmatpush1.msra.mxu0 0.0
        %700 = vmatprep.subr.mxu0 0.0
        %701 = vmatpush1.msra.mxu0 0.0
        %702 = vmatprep.subr.mxu0 0.0
        %703 = vmatpush1.msra.mxu0 0.0
        %704 = vmatprep.subr.mxu0 0.0
        %705 = vmatpush1.msra.mxu0 0.0
        %706 = vmatprep.subr.mxu0 0.0
        %707 = vmatpush1.msra.mxu0 0.0
        %708 = vmatprep.subr.mxu0 0.0
        %709 = vmatpush1.msra.mxu0 0.0
        %710 = vmatprep.subr.mxu0 0.0
        %711 = vmatpush1.msra.mxu0 0.0
        %712 = vmatprep.subr.mxu0 0.0
        %713 = vmatpush1.msra.mxu0 0.0
        %714 = vmatprep.subr.mxu0 0.0
        %715 = vmatpush1.msra.mxu0 0.0
        %716 = vmatprep.subr.mxu0 0.0
        %717 = vmatpush1.msra.mxu0 0.0
        %718 = vmatprep.mubr.f32.mxu0 0.0
        %v719 = vand.u32 %v179, 4294901760
        %v720 = vsub.f32 %v179, %v719
        %v721 = vand.u32 %v720, 4294901760
        %722 = vmatmul.mubr.f32.gmra.mrb[0].mxu0 %v721
        %v723 = vpop.f32.mrb[0].mxu0
        %v724 = vadd.f32 %v614, %v723
        %v725 = vpop.f32.mrb[0].mxu0
        %726 = vmatprep.mubr.f32.mxu0 0.0
        %v727 = vand.u32 %v180, 4294901760
        %v728 = vsub.f32 %v180, %v727
        %v729 = vand.u32 %v728, 4294901760
        %730 = vmatmul.mubr.f32.gmra.mrb[0].mxu0 %v729
        %v731 = vpop.f32.mrb[0].mxu0
        %v732 = vadd.f32 %v621, %v731
        %v733 = vpop.f32.mrb[0].mxu0
        %734 = vmatprep.mubr.f32.mxu0 0.0
        %v735 = vand.u32 %v181, 4294901760
        %v736 = vsub.f32 %v181, %v735
        %v737 = vand.u32 %v736, 4294901760
        %738 = vmatmul.mubr.f32.gmra.mrb[0].mxu0 %v737
        %v739 = vpop.f32.mrb[0].mxu0
        %v740 = vadd.f32 %v628, %v739
        %v741 = vpop.f32.mrb[0].mxu0
        %742 = vmatprep.mubr.f32.mxu0 0.0
        %v743 = vand.u32 %v182, 4294901760
        %v744 = vsub.f32 %v182, %v743
        %v745 = vand.u32 %v744, 4294901760
        %746 = vmatmul.mubr.f32.gmra.mrb[0].mxu0 %v745
        %v747 = vpop.f32.mrb[0].mxu0
        %v748 = vadd.f32 %v635, %v747
        %v749 = vpop.f32.mrb[0].mxu0
        %750 = vdwg.mxu0
        %751 = vmatprep.subr.mxu0 0.0
        %v752 = vand.u32 %v183, 4294901760
        %v753 = vsub.f32 %v183, %v752
        %v754 = vand.u32 %v753, 4294901760
        %755 = vmatpush1.msra.mxu0 %v754
        %756 = vmatprep.subr.mxu0 0.0
        %v757 = vand.u32 %v184, 4294901760
        %v758 = vsub.f32 %v184, %v757
        %v759 = vand.u32 %v758, 4294901760
        %760 = vmatpush1.msra.mxu0 %v759
        %761 = vmatprep.subr.mxu0 0.0
        %v762 = vand.u32 %v185, 4294901760
        %v763 = vsub.f32 %v185, %v762
        %v764 = vand.u32 %v763, 4294901760
        %765 = vmatpush1.msra.mxu0 %v764
        %766 = vmatprep.subr.mxu0 0.0
        %v767 = vand.u32 %v186, 4294901760
        %v768 = vsub.f32 %v186, %v767
        %v769 = vand.u32 %v768, 4294901760
        %770 = vmatpush1.msra.mxu0 %v769
        %771 = vmatprep.subr.mxu0 0.0
        %v772 = vand.u32 %v187, 4294901760
        %v773 = vsub.f32 %v187, %v772
        %v774 = vand.u32 %v773, 4294901760
        %775 = vmatpush1.msra.mxu0 %v774
        %776 = vmatprep.subr.mxu0 0.0
        %v777 = vand.u32 %v188, 4294901760
        %v778 = vsub.f32 %v188, %v777
        %v779 = vand.u32 %v778, 4294901760
        %780 = vmatpush1.msra.mxu0 %v779
        %781 = vmatprep.subr.mxu0 0.0
        %v782 = vand.u32 %v189, 4294901760
        %v783 = vsub.f32 %v189, %v782
        %v784 = vand.u32 %v783, 4294901760
        %785 = vmatpush1.msra.mxu0 %v784
        %786 = vmatprep.subr.mxu0 0.0
        %v787 = vand.u32 %v190, 4294901760
        %v788 = vsub.f32 %v190, %v787
        %v789 = vand.u32 %v788, 4294901760
        %790 = vmatpush1.msra.mxu0 %v789
        %791 = vmatprep.subr.mxu0 0.0
        %v792 = vand.u32 %v191, 4294901760
        %v793 = vsub.f32 %v191, %v792
        %v794 = vand.u32 %v793, 4294901760
        %795 = vmatpush1.msra.mxu0 %v794
        %796 = vmatprep.subr.mxu0 0.0
        %v797 = vand.u32 %v192, 4294901760
        %v798 = vsub.f32 %v192, %v797
        %v799 = vand.u32 %v798, 4294901760
        %800 = vmatpush1.msra.mxu0 %v799
        %801 = vmatprep.subr.mxu0 0.0
        %v802 = vand.u32 %v193, 4294901760
        %v803 = vsub.f32 %v193, %v802
        %v804 = vand.u32 %v803, 4294901760
        %805 = vmatpush1.msra.mxu0 %v804
        %806 = vmatprep.subr.mxu0 0.0
        %v807 = vand.u32 %v194, 4294901760
        %v808 = vsub.f32 %v194, %v807
        %v809 = vand.u32 %v808, 4294901760
        %810 = vmatpush1.msra.mxu0 %v809
        %811 = vmatprep.subr.mxu0 0.0
        %v812 = vand.u32 %v195, 4294901760
        %v813 = vsub.f32 %v195, %v812
        %v814 = vand.u32 %v813, 4294901760
        %815 = vmatpush1.msra.mxu0 %v814
        %816 = vmatprep.subr.mxu0 0.0
        %v817 = vand.u32 %v196, 4294901760
        %v818 = vsub.f32 %v196, %v817
        %v819 = vand.u32 %v818, 4294901760
        %820 = vmatpush1.msra.mxu0 %v819
        %821 = vmatprep.subr.mxu0 0.0
        %v822 = vand.u32 %v197, 4294901760
        %v823 = vsub.f32 %v197, %v822
        %v824 = vand.u32 %v823, 4294901760
        %825 = vmatpush1.msra.mxu0 %v824
        %826 = vmatprep.subr.mxu0 0.0
        %v827 = vand.u32 %v198, 4294901760
        %v828 = vsub.f32 %v198, %v827
        %v829 = vand.u32 %v828, 4294901760
        %830 = vmatpush1.msra.mxu0 %v829
        %831 = vmatprep.subr.mxu0 0.0
        %832 = vmatpush1.msra.mxu0 0.0
        %833 = vmatprep.subr.mxu0 0.0
        %834 = vmatpush1.msra.mxu0 0.0
        %835 = vmatprep.subr.mxu0 0.0
        %836 = vmatpush1.msra.mxu0 0.0
        %837 = vmatprep.subr.mxu0 0.0
        %838 = vmatpush1.msra.mxu0 0.0
        %839 = vmatprep.subr.mxu0 0.0
        %840 = vmatpush1.msra.mxu0 0.0
        %841 = vmatprep.subr.mxu0 0.0
        %842 = vmatpush1.msra.mxu0 0.0
        %843 = vmatprep.subr.mxu0 0.0
        %844 = vmatpush1.msra.mxu0 0.0
        %845 = vmatprep.subr.mxu0 0.0
        %846 = vmatpush1.msra.mxu0 0.0
        %847 = vmatprep.subr.mxu0 0.0
        %848 = vmatpush1.msra.mxu0 0.0
        %849 = vmatprep.subr.mxu0 0.0
        %850 = vmatpush1.msra.mxu0 0.0
        %851 = vmatprep.subr.mxu0 0.0
        %852 = vmatpush1.msra.mxu0 0.0
        %853 = vmatprep.subr.mxu0 0.0
        %854 = vmatpush1.msra.mxu0 0.0
        %855 = vmatprep.subr.mxu0 0.0
        %856 = vmatpush1.msra.mxu0 0.0
        %857 = vmatprep.subr.mxu0 0.0
        %858 = vmatpush1.msra.mxu0 0.0
        %859 = vmatprep.subr.mxu0 0.0
        %860 = vmatpush1.msra.mxu0 0.0
        %861 = vmatprep.subr.mxu0 0.0
        %862 = vmatpush1.msra.mxu0 0.0
        %863 = vmatprep.mubr.f32.mxu0 0.0
        %v864 = vand.u32 %v179, 4294901760
        %865 = vmatmul.mubr.f32.gmra.mrb[0].mxu0 %v864
        %v866 = vpop.f32.mrb[0].mxu0
        %v867 = vadd.f32 %v724, %v866
        %v868 = vpop.f32.mrb[0].mxu0
        %869 = vmatprep.mubr.f32.mxu0 0.0
        %v870 = vand.u32 %v180, 4294901760
        %871 = vmatmul.mubr.f32.gmra.mrb[0].mxu0 %v870
        %v872 = vpop.f32.mrb[0].mxu0
        %v873 = vadd.f32 %v732, %v872
        %v874 = vpop.f32.mrb[0].mxu0
        %875 = vmatprep.mubr.f32.mxu0 0.0
        %v876 = vand.u32 %v181, 4294901760
        %877 = vmatmul.mubr.f32.gmra.mrb[0].mxu0 %v876
        %v878 = vpop.f32.mrb[0].mxu0
        %v879 = vadd.f32 %v740, %v878
        %v880 = vpop.f32.mrb[0].mxu0
        %881 = vmatprep.mubr.f32.mxu0 0.0
        %v882 = vand.u32 %v182, 4294901760
        %883 = vmatmul.mubr.f32.gmra.mrb[0].mxu0 %v882
        %v884 = vpop.f32.mrb[0].mxu0
        %v885 = vadd.f32 %v748, %v884
        %v886 = vpop.f32.mrb[0].mxu0
        %887 = vdwg.mxu0
        %888 = vmatprep.subr.mxu0 0.0
        %v889 = vand.u32 %v183, 4294901760
        %890 = vmatpush1.msra.mxu0 %v889
        %891 = vmatprep.subr.mxu0 0.0
        %v892 = vand.u32 %v184, 4294901760
        %893 = vmatpush1.msra.mxu0 %v892
        %894 = vmatprep.subr.mxu0 0.0
        %v895 = vand.u32 %v185, 4294901760
        %896 = vmatpush1.msra.mxu0 %v895
        %897 = vmatprep.subr.mxu0 0.0
        %v898 = vand.u32 %v186, 4294901760
        %899 = vmatpush1.msra.mxu0 %v898
        %900 = vmatprep.subr.mxu0 0.0
        %v901 = vand.u32 %v187, 4294901760
        %902 = vmatpush1.msra.mxu0 %v901
        %903 = vmatprep.subr.mxu0 0.0
        %v904 = vand.u32 %v188, 4294901760
        %905 = vmatpush1.msra.mxu0 %v904
        %906 = vmatprep.subr.mxu0 0.0
        %v907 = vand.u32 %v189, 4294901760
        %908 = vmatpush1.msra.mxu0 %v907
        %909 = vmatprep.subr.mxu0 0.0
        %v910 = vand.u32 %v190, 4294901760
        %911 = vmatpush1.msra.mxu0 %v910
        %912 = vmatprep.subr.mxu0 0.0
        %v913 = vand.u32 %v191, 4294901760
        %914 = vmatpush1.msra.mxu0 %v913
        %915 = vmatprep.subr.mxu0 0.0
        %v916 = vand.u32 %v192, 4294901760
        %917 = vmatpush1.msra.mxu0 %v916
        %918 = vmatprep.subr.mxu0 0.0
        %v919 = vand.u32 %v193, 4294901760
        %920 = vmatpush1.msra.mxu0 %v919
        %921 = vmatprep.subr.mxu0 0.0
        %v922 = vand.u32 %v194, 4294901760
        %923 = vmatpush1.msra.mxu0 %v922
        %924 = vmatprep.subr.mxu0 0.0
        %v925 = vand.u32 %v195, 4294901760
        %926 = vmatpush1.msra.mxu0 %v925
        %927 = vmatprep.subr.mxu0 0.0
        %v928 = vand.u32 %v196, 4294901760
        %929 = vmatpush1.msra.mxu0 %v928
        %930 = vmatprep.subr.mxu0 0.0
        %v931 = vand.u32 %v197, 4294901760
        %932 = vmatpush1.msra.mxu0 %v931
        %933 = vmatprep.subr.mxu0 0.0
        %v934 = vand.u32 %v198, 4294901760
        %935 = vmatpush1.msra.mxu0 %v934
        %936 = vmatprep.subr.mxu0 0.0
        %937 = vmatpush1.msra.mxu0 0.0
        %938 = vmatprep.subr.mxu0 0.0
        %939 = vmatpush1.msra.mxu0 0.0
        %940 = vmatprep.subr.mxu0 0.0
        %941 = vmatpush1.msra.mxu0 0.0
        %942 = vmatprep.subr.mxu0 0.0
        %943 = vmatpush1.msra.mxu0 0.0
        %944 = vmatprep.subr.mxu0 0.0
        %945 = vmatpush1.msra.mxu0 0.0
        %946 = vmatprep.subr.mxu0 0.0
        %947 = vmatpush1.msra.mxu0 0.0
        %948 = vmatprep.subr.mxu0 0.0
        %949 = vmatpush1.msra.mxu0 0.0
        %950 = vmatprep.subr.mxu0 0.0
        %951 = vmatpush1.msra.mxu0 0.0
        %952 = vmatprep.subr.mxu0 0.0
        %953 = vmatpush1.msra.mxu0 0.0
        %954 = vmatprep.subr.mxu0 0.0
        %955 = vmatpush1.msra.mxu0 0.0
        %956 = vmatprep.subr.mxu0 0.0
        %957 = vmatpush1.msra.mxu0 0.0
        %958 = vmatprep.subr.mxu0 0.0
        %959 = vmatpush1.msra.mxu0 0.0
        %960 = vmatprep.subr.mxu0 0.0
        %961 = vmatpush1.msra.mxu0 0.0
        %962 = vmatprep.subr.mxu0 0.0
        %963 = vmatpush1.msra.mxu0 0.0
        %964 = vmatprep.subr.mxu0 0.0
        %965 = vmatpush1.msra.mxu0 0.0
        %966 = vmatprep.subr.mxu0 0.0
        %967 = vmatpush1.msra.mxu0 0.0
        %968 = vmatprep.mubr.f32.mxu0 0.0
        %v969 = vand.u32 %v179, 4294901760
        %970 = vmatmul.mubr.f32.gmra.mrb[0].mxu0 %v969
        %v971 = vpop.f32.mrb[0].mxu0
        %v972 = vadd.f32 %v867, %v971
        %v973 = vpop.f32.mrb[0].mxu0
        %974 = vmatprep.mubr.f32.mxu0 0.0
        %v975 = vand.u32 %v180, 4294901760
        %976 = vmatmul.mubr.f32.gmra.mrb[0].mxu0 %v975
        %v977 = vpop.f32.mrb[0].mxu0
        %v978 = vadd.f32 %v873, %v977
        %v979 = vpop.f32.mrb[0].mxu0
        %980 = vmatprep.mubr.f32.mxu0 0.0
        %v981 = vand.u32 %v181, 4294901760
        %982 = vmatmul.mubr.f32.gmra.mrb[0].mxu0 %v981
        %v983 = vpop.f32.mrb[0].mxu0
        %v984 = vadd.f32 %v879, %v983
        %v985 = vpop.f32.mrb[0].mxu0
        %986 = vmatprep.mubr.f32.mxu0 0.0
        %v987 = vand.u32 %v182, 4294901760
        %988 = vmatmul.mubr.f32.gmra.mrb[0].mxu0 %v987
        %v989 = vpop.f32.mrb[0].mxu0
        %v990 = vadd.f32 %v885, %v989
        %v991 = vpop.f32.mrb[0].mxu0
        %992 = vdwg.mxu0
        %v993 = vmax.f32 %v972, 0.0
        %v994 = vmax.f32 %v978, 0.0
        %v995 = vmax.f32 %v984, 0.0
        %v996 = vmax.f32 %v990, 0.0
        %v997 = vlaneseq
        %v998 = vshrl.u32 %v997, 7
        %v999 = vsub.s32 0, %v998
        %v1000 = vrot.slane %v201, %v999
        %v1001 = vmul.f32 %v993, %v1000
        %v1002 = vmul.f32 %v994, %v1000
        %v1003 = vmul.f32 %v995, %v1000
        %v1004 = vmul.f32 %v996, %v1000
        %v1005 = vlaneseq
        %v1006 = vshrl.u32 %v1005, 7
        %v1007 = vsub.s32 0, %v1006
        %v1008 = vrot.slane %v200, %v1007
        %1009 = vmatprep.subr.mxu0 0.0
        %v1010 = vand.u32 %v203, 4294901760
        %1011 = vmatpush1.msra.mxu0 %v1010
        %1012 = vmatprep.subr.mxu0 0.0
        %v1013 = vand.u32 %v204, 4294901760
        %1014 = vmatpush1.msra.mxu0 %v1013
        %1015 = vmatprep.subr.mxu0 0.0
        %v1016 = vand.u32 %v205, 4294901760
        %1017 = vmatpush1.msra.mxu0 %v1016
        %1018 = vmatprep.subr.mxu0 0.0
        %v1019 = vand.u32 %v206, 4294901760
        %1020 = vmatpush1.msra.mxu0 %v1019
        %1021 = vmatprep.subr.mxu0 0.0
        %v1022 = vand.u32 %v207, 4294901760
        %1023 = vmatpush1.msra.mxu0 %v1022
        %1024 = vmatprep.subr.mxu0 0.0
        %v1025 = vand.u32 %v208, 4294901760
        %1026 = vmatpush1.msra.mxu0 %v1025
        %1027 = vmatprep.subr.mxu0 0.0
        %v1028 = vand.u32 %v209, 4294901760
        %1029 = vmatpush1.msra.mxu0 %v1028
        %1030 = vmatprep.subr.mxu0 0.0
        %v1031 = vand.u32 %v210, 4294901760
        %1032 = vmatpush1.msra.mxu0 %v1031
        %1033 = vmatprep.subr.mxu0 0.0
        %v1034 = vand.u32 %v211, 4294901760
        %1035 = vmatpush1.msra.mxu0 %v1034
        %1036 = vmatprep.subr.mxu0 0.0
        %v1037 = vand.u32 %v212, 4294901760
        %1038 = vmatpush1.msra.mxu0 %v1037
        %1039 = vmatprep.subr.mxu0 0.0
        %v1040 = vand.u32 %v213, 4294901760
        %1041 = vmatpush1.msra.mxu0 %v1040
        %1042 = vmatprep.subr.mxu0 0.0
        %v1043 = vand.u32 %v214, 4294901760
        %1044 = vmatpush1.msra.mxu0 %v1043
        %1045 = vmatprep.subr.mxu0 0.0
        %v1046 = vand.u32 %v215, 4294901760
        %1047 = vmatpush1.msra.mxu0 %v1046
        %1048 = vmatprep.subr.mxu0 0.0
        %v1049 = vand.u32 %v216, 4294901760
        %1050 = vmatpush1.msra.mxu0 %v1049
        %1051 = vmatprep.subr.mxu0 0.0
        %v1052 = vand.u32 %v217, 4294901760
        %1053 = vmatpush1.msra.mxu0 %v1052
        %1054 = vmatprep.subr.mxu0 0.0
        %v1055 = vand.u32 %v218, 4294901760
        %1056 = vmatpush1.msra.mxu0 %v1055
        %1057 = vmatprep.subr.mxu0 0.0
        %1058 = vmatpush1.msra.mxu0 0.0
        %1059 = vmatprep.subr.mxu0 0.0
        %1060 = vmatpush1.msra.mxu0 0.0
        %1061 = vmatprep.subr.mxu0 0.0
        %1062 = vmatpush1.msra.mxu0 0.0
        %1063 = vmatprep.subr.mxu0 0.0
        %1064 = vmatpush1.msra.mxu0 0.0
        %1065 = vmatprep.subr.mxu0 0.0
        %1066 = vmatpush1.msra.mxu0 0.0
        %1067 = vmatprep.subr.mxu0 0.0
        %1068 = vmatpush1.msra.mxu0 0.0
        %1069 = vmatprep.subr.mxu0 0.0
        %1070 = vmatpush1.msra.mxu0 0.0
        %1071 = vmatprep.subr.mxu0 0.0
        %1072 = vmatpush1.msra.mxu0 0.0
        %1073 = vmatprep.subr.mxu0 0.0
        %1074 = vmatpush1.msra.mxu0 0.0
        %1075 = vmatprep.subr.mxu0 0.0
        %1076 = vmatpush1.msra.mxu0 0.0
        %1077 = vmatprep.subr.mxu0 0.0
        %1078 = vmatpush1.msra.mxu0 0.0
        %1079 = vmatprep.subr.mxu0 0.0
        %1080 = vmatpush1.msra.mxu0 0.0
        %1081 = vmatprep.subr.mxu0 0.0
        %1082 = vmatpush1.msra.mxu0 0.0
        %1083 = vmatprep.subr.mxu0 0.0
        %1084 = vmatpush1.msra.mxu0 0.0
        %1085 = vmatprep.subr.mxu0 0.0
        %1086 = vmatpush1.msra.mxu0 0.0
        %1087 = vmatprep.subr.mxu0 0.0
        %1088 = vmatpush1.msra.mxu0 0.0
        %1089 = vmatprep.mubr.f32.mxu0 0.0
        %v1090 = vand.u32 %v1001, 4294901760
        %v1091 = vsub.f32 %v1001, %v1090
        %v1092 = vand.u32 %v1091, 4294901760
        %v1093 = vsub.f32 %v1091, %v1092
        %v1094 = vand.u32 %v1093, 4294901760
        %1095 = vmatmul.mubr.f32.gmra.mrb[0].mxu0 %v1094
        %v1096 = vpop.f32.mrb[0].mxu0
        %v1097 = vadd.f32 %v1008, %v1096
        %v1098 = vpop.f32.mrb[0].mxu0
        %1099 = vmatprep.mubr.f32.mxu0 0.0
        %v1100 = vand.u32 %v1002, 4294901760
        %v1101 = vsub.f32 %v1002, %v1100
        %v1102 = vand.u32 %v1101, 4294901760
        %v1103 = vsub.f32 %v1101, %v1102
        %v1104 = vand.u32 %v1103, 4294901760
        %1105 = vmatmul.mubr.f32.gmra.mrb[0].mxu0 %v1104
        %v1106 = vpop.f32.mrb[0].mxu0
        %v1107 = vadd.f32 %v1008, %v1106
        %v1108 = vpop.f32.mrb[0].mxu0
        %1109 = vmatprep.mubr.f32.mxu0 0.0
        %v1110 = vand.u32 %v1003, 4294901760
        %v1111 = vsub.f32 %v1003, %v1110
        %v1112 = vand.u32 %v1111, 4294901760
        %v1113 = vsub.f32 %v1111, %v1112
        %v1114 = vand.u32 %v1113, 4294901760
        %1115 = vmatmul.mubr.f32.gmra.mrb[0].mxu0 %v1114
        %v1116 = vpop.f32.mrb[0].mxu0
        %v1117 = vadd.f32 %v1008, %v1116
        %v1118 = vpop.f32.mrb[0].mxu0
        %1119 = vmatprep.mubr.f32.mxu0 0.0
        %v1120 = vand.u32 %v1004, 4294901760
        %v1121 = vsub.f32 %v1004, %v1120
        %v1122 = vand.u32 %v1121, 4294901760
        %v1123 = vsub.f32 %v1121, %v1122
        %v1124 = vand.u32 %v1123, 4294901760
        %1125 = vmatmul.mubr.f32.gmra.mrb[0].mxu0 %v1124
        %v1126 = vpop.f32.mrb[0].mxu0
        %v1127 = vadd.f32 %v1008, %v1126
        %v1128 = vpop.f32.mrb[0].mxu0
        %1129 = vdwg.mxu0
        %1130 = vmatprep.subr.mxu0 0.0
        %v1131 = vand.u32 %v203, 4294901760
        %v1132 = vsub.f32 %v203, %v1131
        %v1133 = vand.u32 %v1132, 4294901760
        %v1134 = vsub.f32 %v1132, %v1133
        %v1135 = vand.u32 %v1134, 4294901760
        %1136 = vmatpush1.msra.mxu0 %v1135
        %1137 = vmatprep.subr.mxu0 0.0
        %v1138 = vand.u32 %v204, 4294901760
        %v1139 = vsub.f32 %v204, %v1138
        %v1140 = vand.u32 %v1139, 4294901760
        %v1141 = vsub.f32 %v1139, %v1140
        %v1142 = vand.u32 %v1141, 4294901760
        %1143 = vmatpush1.msra.mxu0 %v1142
        %1144 = vmatprep.subr.mxu0 0.0
        %v1145 = vand.u32 %v205, 4294901760
        %v1146 = vsub.f32 %v205, %v1145
        %v1147 = vand.u32 %v1146, 4294901760
        %v1148 = vsub.f32 %v1146, %v1147
        %v1149 = vand.u32 %v1148, 4294901760
        %1150 = vmatpush1.msra.mxu0 %v1149
        %1151 = vmatprep.subr.mxu0 0.0
        %v1152 = vand.u32 %v206, 4294901760
        %v1153 = vsub.f32 %v206, %v1152
        %v1154 = vand.u32 %v1153, 4294901760
        %v1155 = vsub.f32 %v1153, %v1154
        %v1156 = vand.u32 %v1155, 4294901760
        %1157 = vmatpush1.msra.mxu0 %v1156
        %1158 = vmatprep.subr.mxu0 0.0
        %v1159 = vand.u32 %v207, 4294901760
        %v1160 = vsub.f32 %v207, %v1159
        %v1161 = vand.u32 %v1160, 4294901760
        %v1162 = vsub.f32 %v1160, %v1161
        %v1163 = vand.u32 %v1162, 4294901760
        %1164 = vmatpush1.msra.mxu0 %v1163
        %1165 = vmatprep.subr.mxu0 0.0
        %v1166 = vand.u32 %v208, 4294901760
        %v1167 = vsub.f32 %v208, %v1166
        %v1168 = vand.u32 %v1167, 4294901760
        %v1169 = vsub.f32 %v1167, %v1168
        %v1170 = vand.u32 %v1169, 4294901760
        %1171 = vmatpush1.msra.mxu0 %v1170
        %1172 = vmatprep.subr.mxu0 0.0
        %v1173 = vand.u32 %v209, 4294901760
        %v1174 = vsub.f32 %v209, %v1173
        %v1175 = vand.u32 %v1174, 4294901760
        %v1176 = vsub.f32 %v1174, %v1175
        %v1177 = vand.u32 %v1176, 4294901760
        %1178 = vmatpush1.msra.mxu0 %v1177
        %1179 = vmatprep.subr.mxu0 0.0
        %v1180 = vand.u32 %v210, 4294901760
        %v1181 = vsub.f32 %v210, %v1180
        %v1182 = vand.u32 %v1181, 4294901760
        %v1183 = vsub.f32 %v1181, %v1182
        %v1184 = vand.u32 %v1183, 4294901760
        %1185 = vmatpush1.msra.mxu0 %v1184
        %1186 = vmatprep.subr.mxu0 0.0
        %v1187 = vand.u32 %v211, 4294901760
        %v1188 = vsub.f32 %v211, %v1187
        %v1189 = vand.u32 %v1188, 4294901760
        %v1190 = vsub.f32 %v1188, %v1189
        %v1191 = vand.u32 %v1190, 4294901760
        %1192 = vmatpush1.msra.mxu0 %v1191
        %1193 = vmatprep.subr.mxu0 0.0
        %v1194 = vand.u32 %v212, 4294901760
        %v1195 = vsub.f32 %v212, %v1194
        %v1196 = vand.u32 %v1195, 4294901760
        %v1197 = vsub.f32 %v1195, %v1196
        %v1198 = vand.u32 %v1197, 4294901760
        %1199 = vmatpush1.msra.mxu0 %v1198
        %1200 = vmatprep.subr.mxu0 0.0
        %v1201 = vand.u32 %v213, 4294901760
        %v1202 = vsub.f32 %v213, %v1201
        %v1203 = vand.u32 %v1202, 4294901760
        %v1204 = vsub.f32 %v1202, %v1203
        %v1205 = vand.u32 %v1204, 4294901760
        %1206 = vmatpush1.msra.mxu0 %v1205
        %1207 = vmatprep.subr.mxu0 0.0
        %v1208 = vand.u32 %v214, 4294901760
        %v1209 = vsub.f32 %v214, %v1208
        %v1210 = vand.u32 %v1209, 4294901760
        %v1211 = vsub.f32 %v1209, %v1210
        %v1212 = vand.u32 %v1211, 4294901760
        %1213 = vmatpush1.msra.mxu0 %v1212
        %1214 = vmatprep.subr.mxu0 0.0
        %v1215 = vand.u32 %v215, 4294901760
        %v1216 = vsub.f32 %v215, %v1215
        %v1217 = vand.u32 %v1216, 4294901760
        %v1218 = vsub.f32 %v1216, %v1217
        %v1219 = vand.u32 %v1218, 4294901760
        %1220 = vmatpush1.msra.mxu0 %v1219
        %1221 = vmatprep.subr.mxu0 0.0
        %v1222 = vand.u32 %v216, 4294901760
        %v1223 = vsub.f32 %v216, %v1222
        %v1224 = vand.u32 %v1223, 4294901760
        %v1225 = vsub.f32 %v1223, %v1224
        %v1226 = vand.u32 %v1225, 4294901760
        %1227 = vmatpush1.msra.mxu0 %v1226
        %1228 = vmatprep.subr.mxu0 0.0
        %v1229 = vand.u32 %v217, 4294901760
        %v1230 = vsub.f32 %v217, %v1229
        %v1231 = vand.u32 %v1230, 4294901760
        %v1232 = vsub.f32 %v1230, %v1231
        %v1233 = vand.u32 %v1232, 4294901760
        %1234 = vmatpush1.msra.mxu0 %v1233
        %1235 = vmatprep.subr.mxu0 0.0
        %v1236 = vand.u32 %v218, 4294901760
        %v1237 = vsub.f32 %v218, %v1236
        %v1238 = vand.u32 %v1237, 4294901760
        %v1239 = vsub.f32 %v1237, %v1238
        %v1240 = vand.u32 %v1239, 4294901760
        %1241 = vmatpush1.msra.mxu0 %v1240
        %1242 = vmatprep.subr.mxu0 0.0
        %1243 = vmatpush1.msra.mxu0 0.0
        %1244 = vmatprep.subr.mxu0 0.0
        %1245 = vmatpush1.msra.mxu0 0.0
        %1246 = vmatprep.subr.mxu0 0.0
        %1247 = vmatpush1.msra.mxu0 0.0
        %1248 = vmatprep.subr.mxu0 0.0
        %1249 = vmatpush1.msra.mxu0 0.0
        %1250 = vmatprep.subr.mxu0 0.0
        %1251 = vmatpush1.msra.mxu0 0.0
        %1252 = vmatprep.subr.mxu0 0.0
        %1253 = vmatpush1.msra.mxu0 0.0
        %1254 = vmatprep.subr.mxu0 0.0
        %1255 = vmatpush1.msra.mxu0 0.0
        %1256 = vmatprep.subr.mxu0 0.0
        %1257 = vmatpush1.msra.mxu0 0.0
        %1258 = vmatprep.subr.mxu0 0.0
        %1259 = vmatpush1.msra.mxu0 0.0
        %1260 = vmatprep.subr.mxu0 0.0
        %1261 = vmatpush1.msra.mxu0 0.0
        %1262 = vmatprep.subr.mxu0 0.0
        %1263 = vmatpush1.msra.mxu0 0.0
        %1264 = vmatprep.subr.mxu0 0.0
        %1265 = vmatpush1.msra.mxu0 0.0
        %1266 = vmatprep.subr.mxu0 0.0
        %1267 = vmatpush1.msra.mxu0 0.0
        %1268 = vmatprep.subr.mxu0 0.0
        %1269 = vmatpush1.msra.mxu0 0.0
        %1270 = vmatprep.subr.mxu0 0.0
        %1271 = vmatpush1.msra.mxu0 0.0
        %1272 = vmatprep.subr.mxu0 0.0
        %1273 = vmatpush1.msra.mxu0 0.0
        %1274 = vmatprep.mubr.f32.mxu0 0.0
        %v1275 = vand.u32 %v1001, 4294901760
        %1276 = vmatmul.mubr.f32.gmra.mrb[0].mxu0 %v1275
        %v1277 = vpop.f32.mrb[0].mxu0
        %v1278 = vadd.f32 %v1097, %v1277
        %v1279 = vpop.f32.mrb[0].mxu0
        %1280 = vmatprep.mubr.f32.mxu0 0.0
        %v1281 = vand.u32 %v1002, 4294901760
        %1282 = vmatmul.mubr.f32.gmra.mrb[0].mxu0 %v1281
        %v1283 = vpop.f32.mrb[0].mxu0
        %v1284 = vadd.f32 %v1107, %v1283
        %v1285 = vpop.f32.mrb[0].mxu0
        %1286 = vmatprep.mubr.f32.mxu0 0.0
        %v1287 = vand.u32 %v1003, 4294901760
        %1288 = vmatmul.mubr.f32.gmra.mrb[0].mxu0 %v1287
        %v1289 = vpop.f32.mrb[0].mxu0
        %v1290 = vadd.f32 %v1117, %v1289
        %v1291 = vpop.f32.mrb[0].mxu0
        %1292 = vmatprep.mubr.f32.mxu0 0.0
        %v1293 = vand.u32 %v1004, 4294901760
        %1294 = vmatmul.mubr.f32.gmra.mrb[0].mxu0 %v1293
        %v1295 = vpop.f32.mrb[0].mxu0
        %v1296 = vadd.f32 %v1127, %v1295
        %v1297 = vpop.f32.mrb[0].mxu0
        %1298 = vdwg.mxu0
        %1299 = vmatprep.subr.mxu0 0.0
        %v1300 = vand.u32 %v203, 4294901760
        %v1301 = vsub.f32 %v203, %v1300
        %1302 = vmatpush1.msra.mxu0 %v1301
        %1303 = vmatprep.subr.mxu0 0.0
        %v1304 = vand.u32 %v204, 4294901760
        %v1305 = vsub.f32 %v204, %v1304
        %1306 = vmatpush1.msra.mxu0 %v1305
        %1307 = vmatprep.subr.mxu0 0.0
        %v1308 = vand.u32 %v205, 4294901760
        %v1309 = vsub.f32 %v205, %v1308
        %1310 = vmatpush1.msra.mxu0 %v1309
        %1311 = vmatprep.subr.mxu0 0.0
        %v1312 = vand.u32 %v206, 4294901760
        %v1313 = vsub.f32 %v206, %v1312
        %1314 = vmatpush1.msra.mxu0 %v1313
        %1315 = vmatprep.subr.mxu0 0.0
        %v1316 = vand.u32 %v207, 4294901760
        %v1317 = vsub.f32 %v207, %v1316
        %1318 = vmatpush1.msra.mxu0 %v1317
        %1319 = vmatprep.subr.mxu0 0.0
        %v1320 = vand.u32 %v208, 4294901760
        %v1321 = vsub.f32 %v208, %v1320
        %1322 = vmatpush1.msra.mxu0 %v1321
        %1323 = vmatprep.subr.mxu0 0.0
        %v1324 = vand.u32 %v209, 4294901760
        %v1325 = vsub.f32 %v209, %v1324
        %1326 = vmatpush1.msra.mxu0 %v1325
        %1327 = vmatprep.subr.mxu0 0.0
        %v1328 = vand.u32 %v210, 4294901760
        %v1329 = vsub.f32 %v210, %v1328
        %1330 = vmatpush1.msra.mxu0 %v1329
        %1331 = vmatprep.subr.mxu0 0.0
        %v1332 = vand.u32 %v211, 4294901760
        %v1333 = vsub.f32 %v211, %v1332
        %1334 = vmatpush1.msra.mxu0 %v1333
        %1335 = vmatprep.subr.mxu0 0.0
        %v1336 = vand.u32 %v212, 4294901760
        %v1337 = vsub.f32 %v212, %v1336
        %1338 = vmatpush1.msra.mxu0 %v1337
        %1339 = vmatprep.subr.mxu0 0.0
        %v1340 = vand.u32 %v213, 4294901760
        %v1341 = vsub.f32 %v213, %v1340
        %1342 = vmatpush1.msra.mxu0 %v1341
        %1343 = vmatprep.subr.mxu0 0.0
        %v1344 = vand.u32 %v214, 4294901760
        %v1345 = vsub.f32 %v214, %v1344
        %1346 = vmatpush1.msra.mxu0 %v1345
        %1347 = vmatprep.subr.mxu0 0.0
        %v1348 = vand.u32 %v215, 4294901760
        %v1349 = vsub.f32 %v215, %v1348
        %1350 = vmatpush1.msra.mxu0 %v1349
        %1351 = vmatprep.subr.mxu0 0.0
        %v1352 = vand.u32 %v216, 4294901760
        %v1353 = vsub.f32 %v216, %v1352
        %1354 = vmatpush1.msra.mxu0 %v1353
        %1355 = vmatprep.subr.mxu0 0.0
        %v1356 = vand.u32 %v217, 4294901760
        %v1357 = vsub.f32 %v217, %v1356
        %1358 = vmatpush1.msra.mxu0 %v1357
        %1359 = vmatprep.subr.mxu0 0.0
        %v1360 = vand.u32 %v218, 4294901760
        %v1361 = vsub.f32 %v218, %v1360
        %1362 = vmatpush1.msra.mxu0 %v1361
        %1363 = vmatprep.subr.mxu0 0.0
        %1364 = vmatpush1.msra.mxu0 0.0
        %1365 = vmatprep.subr.mxu0 0.0
        %1366 = vmatpush1.msra.mxu0 0.0
        %1367 = vmatprep.subr.mxu0 0.0
        %1368 = vmatpush1.msra.mxu0 0.0
        %1369 = vmatprep.subr.mxu0 0.0
        %1370 = vmatpush1.msra.mxu0 0.0
        %1371 = vmatprep.subr.mxu0 0.0
        %1372 = vmatpush1.msra.mxu0 0.0
        %1373 = vmatprep.subr.mxu0 0.0
        %1374 = vmatpush1.msra.mxu0 0.0
        %1375 = vmatprep.subr.mxu0 0.0
        %1376 = vmatpush1.msra.mxu0 0.0
        %1377 = vmatprep.subr.mxu0 0.0
        %1378 = vmatpush1.msra.mxu0 0.0
        %1379 = vmatprep.subr.mxu0 0.0
        %1380 = vmatpush1.msra.mxu0 0.0
        %1381 = vmatprep.subr.mxu0 0.0
        %1382 = vmatpush1.msra.mxu0 0.0
        %1383 = vmatprep.subr.mxu0 0.0
        %1384 = vmatpush1.msra.mxu0 0.0
        %1385 = vmatprep.subr.mxu0 0.0
        %1386 = vmatpush1.msra.mxu0 0.0
        %1387 = vmatprep.subr.mxu0 0.0
        %1388 = vmatpush1.msra.mxu0 0.0
        %1389 = vmatprep.subr.mxu0 0.0
        %1390 = vmatpush1.msra.mxu0 0.0
        %1391 = vmatprep.subr.mxu0 0.0
        %1392 = vmatpush1.msra.mxu0 0.0
        %1393 = vmatprep.subr.mxu0 0.0
        %1394 = vmatpush1.msra.mxu0 0.0
        %1395 = vmatprep.mubr.f32.mxu0 0.0
        %v1396 = vand.u32 %v1001, 4294901760
        %v1397 = vsub.f32 %v1001, %v1396
        %1398 = vmatmul.mubr.f32.gmra.mrb[0].mxu0 %v1397
        %v1399 = vpop.f32.mrb[0].mxu0
        %v1400 = vadd.f32 %v1278, %v1399
        %v1401 = vpop.f32.mrb[0].mxu0
        %1402 = vmatprep.mubr.f32.mxu0 0.0
        %v1403 = vand.u32 %v1002, 4294901760
        %v1404 = vsub.f32 %v1002, %v1403
        %1405 = vmatmul.mubr.f32.gmra.mrb[0].mxu0 %v1404
        %v1406 = vpop.f32.mrb[0].mxu0
        %v1407 = vadd.f32 %v1284, %v1406
        %v1408 = vpop.f32.mrb[0].mxu0
        %1409 = vmatprep.mubr.f32.mxu0 0.0
        %v1410 = vand.u32 %v1003, 4294901760
        %v1411 = vsub.f32 %v1003, %v1410
        %1412 = vmatmul.mubr.f32.gmra.mrb[0].mxu0 %v1411
        %v1413 = vpop.f32.mrb[0].mxu0
        %v1414 = vadd.f32 %v1290, %v1413
        %v1415 = vpop.f32.mrb[0].mxu0
        %1416 = vmatprep.mubr.f32.mxu0 0.0
        %v1417 = vand.u32 %v1004, 4294901760
        %v1418 = vsub.f32 %v1004, %v1417
        %1419 = vmatmul.mubr.f32.gmra.mrb[0].mxu0 %v1418
        %v1420 = vpop.f32.mrb[0].mxu0
        %v1421 = vadd.f32 %v1296, %v1420
        %v1422 = vpop.f32.mrb[0].mxu0
        %1423 = vdwg.mxu0
        %1424 = vmatprep.subr.mxu0 0.0
        %v1425 = vand.u32 %v203, 4294901760
        %1426 = vmatpush1.msra.mxu0 %v1425
        %1427 = vmatprep.subr.mxu0 0.0
        %v1428 = vand.u32 %v204, 4294901760
        %1429 = vmatpush1.msra.mxu0 %v1428
        %1430 = vmatprep.subr.mxu0 0.0
        %v1431 = vand.u32 %v205, 4294901760
        %1432 = vmatpush1.msra.mxu0 %v1431
        %1433 = vmatprep.subr.mxu0 0.0
        %v1434 = vand.u32 %v206, 4294901760
        %1435 = vmatpush1.msra.mxu0 %v1434
        %1436 = vmatprep.subr.mxu0 0.0
        %v1437 = vand.u32 %v207, 4294901760
        %1438 = vmatpush1.msra.mxu0 %v1437
        %1439 = vmatprep.subr.mxu0 0.0
        %v1440 = vand.u32 %v208, 4294901760
        %1441 = vmatpush1.msra.mxu0 %v1440
        %1442 = vmatprep.subr.mxu0 0.0
        %v1443 = vand.u32 %v209, 4294901760
        %1444 = vmatpush1.msra.mxu0 %v1443
        %1445 = vmatprep.subr.mxu0 0.0
        %v1446 = vand.u32 %v210, 4294901760
        %1447 = vmatpush1.msra.mxu0 %v1446
        %1448 = vmatprep.subr.mxu0 0.0
        %v1449 = vand.u32 %v211, 4294901760
        %1450 = vmatpush1.msra.mxu0 %v1449
        %1451 = vmatprep.subr.mxu0 0.0
        %v1452 = vand.u32 %v212, 4294901760
        %1453 = vmatpush1.msra.mxu0 %v1452
        %1454 = vmatprep.subr.mxu0 0.0
        %v1455 = vand.u32 %v213, 4294901760
        %1456 = vmatpush1.msra.mxu0 %v1455
        %1457 = vmatprep.subr.mxu0 0.0
        %v1458 = vand.u32 %v214, 4294901760
        %1459 = vmatpush1.msra.mxu0 %v1458
        %1460 = vmatprep.subr.mxu0 0.0
        %v1461 = vand.u32 %v215, 4294901760
        %1462 = vmatpush1.msra.mxu0 %v1461
        %1463 = vmatprep.subr.mxu0 0.0
        %v1464 = vand.u32 %v216, 4294901760
        %1465 = vmatpush1.msra.mxu0 %v1464
        %1466 = vmatprep.subr.mxu0 0.0
        %v1467 = vand.u32 %v217, 4294901760
        %1468 = vmatpush1.msra.mxu0 %v1467
        %1469 = vmatprep.subr.mxu0 0.0
        %v1470 = vand.u32 %v218, 4294901760
        %1471 = vmatpush1.msra.mxu0 %v1470
        %1472 = vmatprep.subr.mxu0 0.0
        %1473 = vmatpush1.msra.mxu0 0.0
        %1474 = vmatprep.subr.mxu0 0.0
        %1475 = vmatpush1.msra.mxu0 0.0
        %1476 = vmatprep.subr.mxu0 0.0
        %1477 = vmatpush1.msra.mxu0 0.0
        %1478 = vmatprep.subr.mxu0 0.0
        %1479 = vmatpush1.msra.mxu0 0.0
        %1480 = vmatprep.subr.mxu0 0.0
        %1481 = vmatpush1.msra.mxu0 0.0
        %1482 = vmatprep.subr.mxu0 0.0
        %1483 = vmatpush1.msra.mxu0 0.0
        %1484 = vmatprep.subr.mxu0 0.0
        %1485 = vmatpush1.msra.mxu0 0.0
        %1486 = vmatprep.subr.mxu0 0.0
        %1487 = vmatpush1.msra.mxu0 0.0
        %1488 = vmatprep.subr.mxu0 0.0
        %1489 = vmatpush1.msra.mxu0 0.0
        %1490 = vmatprep.subr.mxu0 0.0
        %1491 = vmatpush1.msra.mxu0 0.0
        %1492 = vmatprep.subr.mxu0 0.0
        %1493 = vmatpush1.msra.mxu0 0.0
        %1494 = vmatprep.subr.mxu0 0.0
        %1495 = vmatpush1.msra.mxu0 0.0
        %1496 = vmatprep.subr.mxu0 0.0
        %1497 = vmatpush1.msra.mxu0 0.0
        %1498 = vmatprep.subr.mxu0 0.0
        %1499 = vmatpush1.msra.mxu0 0.0
        %1500 = vmatprep.subr.mxu0 0.0
        %1501 = vmatpush1.msra.mxu0 0.0
        %1502 = vmatprep.subr.mxu0 0.0
        %1503 = vmatpush1.msra.mxu0 0.0
        %1504 = vmatprep.mubr.f32.mxu0 0.0
        %v1505 = vand.u32 %v1001, 4294901760
        %v1506 = vsub.f32 %v1001, %v1505
        %v1507 = vand.u32 %v1506, 4294901760
        %1508 = vmatmul.mubr.f32.gmra.mrb[0].mxu0 %v1507
        %v1509 = vpop.f32.mrb[0].mxu0
        %v1510 = vadd.f32 %v1400, %v1509
        %v1511 = vpop.f32.mrb[0].mxu0
        %1512 = vmatprep.mubr.f32.mxu0 0.0
        %v1513 = vand.u32 %v1002, 4294901760
        %v1514 = vsub.f32 %v1002, %v1513
        %v1515 = vand.u32 %v1514, 4294901760
        %1516 = vmatmul.mubr.f32.gmra.mrb[0].mxu0 %v1515
        %v1517 = vpop.f32.mrb[0].mxu0
        %v1518 = vadd.f32 %v1407, %v1517
        %v1519 = vpop.f32.mrb[0].mxu0
        %1520 = vmatprep.mubr.f32.mxu0 0.0
        %v1521 = vand.u32 %v1003, 4294901760
        %v1522 = vsub.f32 %v1003, %v1521
        %v1523 = vand.u32 %v1522, 4294901760
        %1524 = vmatmul.mubr.f32.gmra.mrb[0].mxu0 %v1523
        %v1525 = vpop.f32.mrb[0].mxu0
        %v1526 = vadd.f32 %v1414, %v1525
        %v1527 = vpop.f32.mrb[0].mxu0
        %1528 = vmatprep.mubr.f32.mxu0 0.0
        %v1529 = vand.u32 %v1004, 4294901760
        %v1530 = vsub.f32 %v1004, %v1529
        %v1531 = vand.u32 %v1530, 4294901760
        %1532 = vmatmul.mubr.f32.gmra.mrb[0].mxu0 %v1531
        %v1533 = vpop.f32.mrb[0].mxu0
        %v1534 = vadd.f32 %v1421, %v1533
        %v1535 = vpop.f32.mrb[0].mxu0
        %1536 = vdwg.mxu0
        %1537 = vmatprep.subr.mxu0 0.0
        %v1538 = vand.u32 %v203, 4294901760
        %v1539 = vsub.f32 %v203, %v1538
        %v1540 = vand.u32 %v1539, 4294901760
        %1541 = vmatpush1.msra.mxu0 %v1540
        %1542 = vmatprep.subr.mxu0 0.0
        %v1543 = vand.u32 %v204, 4294901760
        %v1544 = vsub.f32 %v204, %v1543
        %v1545 = vand.u32 %v1544, 4294901760
        %1546 = vmatpush1.msra.mxu0 %v1545
        %1547 = vmatprep.subr.mxu0 0.0
        %v1548 = vand.u32 %v205, 4294901760
        %v1549 = vsub.f32 %v205, %v1548
        %v1550 = vand.u32 %v1549, 4294901760
        %1551 = vmatpush1.msra.mxu0 %v1550
        %1552 = vmatprep.subr.mxu0 0.0
        %v1553 = vand.u32 %v206, 4294901760
        %v1554 = vsub.f32 %v206, %v1553
        %v1555 = vand.u32 %v1554, 4294901760
        %1556 = vmatpush1.msra.mxu0 %v1555
        %1557 = vmatprep.subr.mxu0 0.0
        %v1558 = vand.u32 %v207, 4294901760
        %v1559 = vsub.f32 %v207, %v1558
        %v1560 = vand.u32 %v1559, 4294901760
        %1561 = vmatpush1.msra.mxu0 %v1560
        %1562 = vmatprep.subr.mxu0 0.0
        %v1563 = vand.u32 %v208, 4294901760
        %v1564 = vsub.f32 %v208, %v1563
        %v1565 = vand.u32 %v1564, 4294901760
        %1566 = vmatpush1.msra.mxu0 %v1565
        %1567 = vmatprep.subr.mxu0 0.0
        %v1568 = vand.u32 %v209, 4294901760
        %v1569 = vsub.f32 %v209, %v1568
        %v1570 = vand.u32 %v1569, 4294901760
        %1571 = vmatpush1.msra.mxu0 %v1570
        %1572 = vmatprep.subr.mxu0 0.0
        %v1573 = vand.u32 %v210, 4294901760
        %v1574 = vsub.f32 %v210, %v1573
        %v1575 = vand.u32 %v1574, 4294901760
        %1576 = vmatpush1.msra.mxu0 %v1575
        %1577 = vmatprep.subr.mxu0 0.0
        %v1578 = vand.u32 %v211, 4294901760
        %v1579 = vsub.f32 %v211, %v1578
        %v1580 = vand.u32 %v1579, 4294901760
        %1581 = vmatpush1.msra.mxu0 %v1580
        %1582 = vmatprep.subr.mxu0 0.0
        %v1583 = vand.u32 %v212, 4294901760
        %v1584 = vsub.f32 %v212, %v1583
        %v1585 = vand.u32 %v1584, 4294901760
        %1586 = vmatpush1.msra.mxu0 %v1585
        %1587 = vmatprep.subr.mxu0 0.0
        %v1588 = vand.u32 %v213, 4294901760
        %v1589 = vsub.f32 %v213, %v1588
        %v1590 = vand.u32 %v1589, 4294901760
        %1591 = vmatpush1.msra.mxu0 %v1590
        %1592 = vmatprep.subr.mxu0 0.0
        %v1593 = vand.u32 %v214, 4294901760
        %v1594 = vsub.f32 %v214, %v1593
        %v1595 = vand.u32 %v1594, 4294901760
        %1596 = vmatpush1.msra.mxu0 %v1595
        %1597 = vmatprep.subr.mxu0 0.0
        %v1598 = vand.u32 %v215, 4294901760
        %v1599 = vsub.f32 %v215, %v1598
        %v1600 = vand.u32 %v1599, 4294901760
        %1601 = vmatpush1.msra.mxu0 %v1600
        %1602 = vmatprep.subr.mxu0 0.0
        %v1603 = vand.u32 %v216, 4294901760
        %v1604 = vsub.f32 %v216, %v1603
        %v1605 = vand.u32 %v1604, 4294901760
        %1606 = vmatpush1.msra.mxu0 %v1605
        %1607 = vmatprep.subr.mxu0 0.0
        %v1608 = vand.u32 %v217, 4294901760
        %v1609 = vsub.f32 %v217, %v1608
        %v1610 = vand.u32 %v1609, 4294901760
        %1611 = vmatpush1.msra.mxu0 %v1610
        %1612 = vmatprep.subr.mxu0 0.0
        %v1613 = vand.u32 %v218, 4294901760
        %v1614 = vsub.f32 %v218, %v1613
        %v1615 = vand.u32 %v1614, 4294901760
        %1616 = vmatpush1.msra.mxu0 %v1615
        %1617 = vmatprep.subr.mxu0 0.0
        %1618 = vmatpush1.msra.mxu0 0.0
        %1619 = vmatprep.subr.mxu0 0.0
        %1620 = vmatpush1.msra.mxu0 0.0
        %1621 = vmatprep.subr.mxu0 0.0
        %1622 = vmatpush1.msra.mxu0 0.0
        %1623 = vmatprep.subr.mxu0 0.0
        %1624 = vmatpush1.msra.mxu0 0.0
        %1625 = vmatprep.subr.mxu0 0.0
        %1626 = vmatpush1.msra.mxu0 0.0
        %1627 = vmatprep.subr.mxu0 0.0
        %1628 = vmatpush1.msra.mxu0 0.0
        %1629 = vmatprep.subr.mxu0 0.0
        %1630 = vmatpush1.msra.mxu0 0.0
        %1631 = vmatprep.subr.mxu0 0.0
        %1632 = vmatpush1.msra.mxu0 0.0
        %1633 = vmatprep.subr.mxu0 0.0
        %1634 = vmatpush1.msra.mxu0 0.0
        %1635 = vmatprep.subr.mxu0 0.0
        %1636 = vmatpush1.msra.mxu0 0.0
        %1637 = vmatprep.subr.mxu0 0.0
        %1638 = vmatpush1.msra.mxu0 0.0
        %1639 = vmatprep.subr.mxu0 0.0
        %1640 = vmatpush1.msra.mxu0 0.0
        %1641 = vmatprep.subr.mxu0 0.0
        %1642 = vmatpush1.msra.mxu0 0.0
        %1643 = vmatprep.subr.mxu0 0.0
        %1644 = vmatpush1.msra.mxu0 0.0
        %1645 = vmatprep.subr.mxu0 0.0
        %1646 = vmatpush1.msra.mxu0 0.0
        %1647 = vmatprep.subr.mxu0 0.0
        %1648 = vmatpush1.msra.mxu0 0.0
        %1649 = vmatprep.mubr.f32.mxu0 0.0
        %v1650 = vand.u32 %v1001, 4294901760
        %1651 = vmatmul.mubr.f32.gmra.mrb[0].mxu0 %v1650
        %v1652 = vpop.f32.mrb[0].mxu0
        %v1653 = vadd.f32 %v1510, %v1652
        %v1654 = vpop.f32.mrb[0].mxu0
        %1655 = vmatprep.mubr.f32.mxu0 0.0
        %v1656 = vand.u32 %v1002, 4294901760
        %1657 = vmatmul.mubr.f32.gmra.mrb[0].mxu0 %v1656
        %v1658 = vpop.f32.mrb[0].mxu0
        %v1659 = vadd.f32 %v1518, %v1658
        %v1660 = vpop.f32.mrb[0].mxu0
        %1661 = vmatprep.mubr.f32.mxu0 0.0
        %v1662 = vand.u32 %v1003, 4294901760
        %1663 = vmatmul.mubr.f32.gmra.mrb[0].mxu0 %v1662
        %v1664 = vpop.f32.mrb[0].mxu0
        %v1665 = vadd.f32 %v1526, %v1664
        %v1666 = vpop.f32.mrb[0].mxu0
        %1667 = vmatprep.mubr.f32.mxu0 0.0
        %v1668 = vand.u32 %v1004, 4294901760
        %1669 = vmatmul.mubr.f32.gmra.mrb[0].mxu0 %v1668
        %v1670 = vpop.f32.mrb[0].mxu0
        %v1671 = vadd.f32 %v1534, %v1670
        %v1672 = vpop.f32.mrb[0].mxu0
        %1673 = vdwg.mxu0
        %1674 = vmatprep.subr.mxu0 0.0
        %v1675 = vand.u32 %v203, 4294901760
        %1676 = vmatpush1.msra.mxu0 %v1675
        %1677 = vmatprep.subr.mxu0 0.0
        %v1678 = vand.u32 %v204, 4294901760
        %1679 = vmatpush1.msra.mxu0 %v1678
        %1680 = vmatprep.subr.mxu0 0.0
        %v1681 = vand.u32 %v205, 4294901760
        %1682 = vmatpush1.msra.mxu0 %v1681
        %1683 = vmatprep.subr.mxu0 0.0
        %v1684 = vand.u32 %v206, 4294901760
        %1685 = vmatpush1.msra.mxu0 %v1684
        %1686 = vmatprep.subr.mxu0 0.0
        %v1687 = vand.u32 %v207, 4294901760
        %1688 = vmatpush1.msra.mxu0 %v1687
        %1689 = vmatprep.subr.mxu0 0.0
        %v1690 = vand.u32 %v208, 4294901760
        %1691 = vmatpush1.msra.mxu0 %v1690
        %1692 = vmatprep.subr.mxu0 0.0
        %v1693 = vand.u32 %v209, 4294901760
        %1694 = vmatpush1.msra.mxu0 %v1693
        %1695 = vmatprep.subr.mxu0 0.0
        %v1696 = vand.u32 %v210, 4294901760
        %1697 = vmatpush1.msra.mxu0 %v1696
        %1698 = vmatprep.subr.mxu0 0.0
        %v1699 = vand.u32 %v211, 4294901760
        %1700 = vmatpush1.msra.mxu0 %v1699
        %1701 = vmatprep.subr.mxu0 0.0
        %v1702 = vand.u32 %v212, 4294901760
        %1703 = vmatpush1.msra.mxu0 %v1702
        %1704 = vmatprep.subr.mxu0 0.0
        %v1705 = vand.u32 %v213, 4294901760
        %1706 = vmatpush1.msra.mxu0 %v1705
        %1707 = vmatprep.subr.mxu0 0.0
        %v1708 = vand.u32 %v214, 4294901760
        %1709 = vmatpush1.msra.mxu0 %v1708
        %1710 = vmatprep.subr.mxu0 0.0
        %v1711 = vand.u32 %v215, 4294901760
        %1712 = vmatpush1.msra.mxu0 %v1711
        %1713 = vmatprep.subr.mxu0 0.0
        %v1714 = vand.u32 %v216, 4294901760
        %1715 = vmatpush1.msra.mxu0 %v1714
        %1716 = vmatprep.subr.mxu0 0.0
        %v1717 = vand.u32 %v217, 4294901760
        %1718 = vmatpush1.msra.mxu0 %v1717
        %1719 = vmatprep.subr.mxu0 0.0
        %v1720 = vand.u32 %v218, 4294901760
        %1721 = vmatpush1.msra.mxu0 %v1720
        %1722 = vmatprep.subr.mxu0 0.0
        %1723 = vmatpush1.msra.mxu0 0.0
        %1724 = vmatprep.subr.mxu0 0.0
        %1725 = vmatpush1.msra.mxu0 0.0
        %1726 = vmatprep.subr.mxu0 0.0
        %1727 = vmatpush1.msra.mxu0 0.0
        %1728 = vmatprep.subr.mxu0 0.0
        %1729 = vmatpush1.msra.mxu0 0.0
        %1730 = vmatprep.subr.mxu0 0.0
        %1731 = vmatpush1.msra.mxu0 0.0
        %1732 = vmatprep.subr.mxu0 0.0
        %1733 = vmatpush1.msra.mxu0 0.0
        %1734 = vmatprep.subr.mxu0 0.0
        %1735 = vmatpush1.msra.mxu0 0.0
        %1736 = vmatprep.subr.mxu0 0.0
        %1737 = vmatpush1.msra.mxu0 0.0
        %1738 = vmatprep.subr.mxu0 0.0
        %1739 = vmatpush1.msra.mxu0 0.0
        %1740 = vmatprep.subr.mxu0 0.0
        %1741 = vmatpush1.msra.mxu0 0.0
        %1742 = vmatprep.subr.mxu0 0.0
        %1743 = vmatpush1.msra.mxu0 0.0
        %1744 = vmatprep.subr.mxu0 0.0
        %1745 = vmatpush1.msra.mxu0 0.0
        %1746 = vmatprep.subr.mxu0 0.0
        %1747 = vmatpush1.msra.mxu0 0.0
        %1748 = vmatprep.subr.mxu0 0.0
        %1749 = vmatpush1.msra.mxu0 0.0
        %1750 = vmatprep.subr.mxu0 0.0
        %1751 = vmatpush1.msra.mxu0 0.0
        %1752 = vmatprep.subr.mxu0 0.0
        %1753 = vmatpush1.msra.mxu0 0.0
        %1754 = vmatprep.mubr.f32.mxu0 0.0
        %v1755 = vand.u32 %v1001, 4294901760
        %1756 = vmatmul.mubr.f32.gmra.mrb[0].mxu0 %v1755
        %v1757 = vpop.f32.mrb[0].mxu0
        %v1758 = vadd.f32 %v1653, %v1757
        %v1759 = vpop.f32.mrb[0].mxu0
        %1760 = vmatprep.mubr.f32.mxu0 0.0
        %v1761 = vand.u32 %v1002, 4294901760
        %1762 = vmatmul.mubr.f32.gmra.mrb[0].mxu0 %v1761
        %v1763 = vpop.f32.mrb[0].mxu0
        %v1764 = vadd.f32 %v1659, %v1763
        %v1765 = vpop.f32.mrb[0].mxu0
        %1766 = vmatprep.mubr.f32.mxu0 0.0
        %v1767 = vand.u32 %v1003, 4294901760
        %1768 = vmatmul.mubr.f32.gmra.mrb[0].mxu0 %v1767
        %v1769 = vpop.f32.mrb[0].mxu0
        %v1770 = vadd.f32 %v1665, %v1769
        %v1771 = vpop.f32.mrb[0].mxu0
        %1772 = vmatprep.mubr.f32.mxu0 0.0
        %v1773 = vand.u32 %v1004, 4294901760
        %1774 = vmatmul.mubr.f32.gmra.mrb[0].mxu0 %v1773
        %v1775 = vpop.f32.mrb[0].mxu0
        %v1776 = vadd.f32 %v1671, %v1775
        %v1777 = vpop.f32.mrb[0].mxu0
        %1778 = vdwg.mxu0
        %v1779 = vtanh.pop %v1758
        %v1780 = vtanh.pop %v1764
        %v1781 = vtanh.pop %v1770
        %v1782 = vtanh.pop %v1776
        %v1783 = vsub.f32 %v1779, %v1001
        %v1784 = vsub.f32 %v1780, %v1002
        %v1785 = vsub.f32 %v1781, %v1003
        %v1786 = vsub.f32 %v1782, %v1004
        %1788 = vset.pattern.permute.xlu0 1
        %1789 = vperm.xlu0 %1788, %v1783
        %v1790 = vpop.permute.xlu0 %1789
        %1793 = vset.pattern.permute.xlu0 1
        %1794 = vperm.xlu0 %1793, %v1784
        %v1795 = vpop.permute.xlu0 %1794
        %1798 = vset.pattern.permute.xlu0 1
        %1799 = vperm.xlu0 %1798, %v1785
        %v1800 = vpop.permute.xlu0 %1799
        %1803 = vset.pattern.permute.xlu0 1
        %1804 = vperm.xlu0 %1803, %v1786
        %v1805 = vpop.permute.xlu0 %1804
        %v1807 = vld [vmem:[#allocation5 + $0x89] sm:$0x1]
        %v1808 = vld [vmem:[#allocation5 + $0x109] sm:$0x1]
        %v1809 = vlaneseq
        %v1810 = vshrl.u32 %v1809, 7
        %v1811 = vsub.s32 0, %v1810
        %v1812 = vrot.slane %v1807, %v1811
        %v1813 = vmul.f32 %v1790, %v1812
        %v1814 = vmul.f32 %v1795, %v1812
        %v1815 = vmul.f32 %v1800, %v1812
        %v1816 = vmul.f32 %v1805, %v1812
        %v1817 = vadd.f32 %v1758, %v1813
        %v1818 = vadd.f32 %v1764, %v1814
        %v1819 = vadd.f32 %v1770, %v1815
        %v1820 = vadd.f32 %v1776, %v1816
        %v1821 = vlaneseq
        %v1822 = vshrl.u32 %v1821, 7
        %v1823 = vsub.s32 0, %v1822
        %v1824 = vrot.slane %v1808, %v1823
        %v1825 = vmul.f32 %v1790, %v1824
        %v1826 = vmul.f32 %v1795, %v1824
        %v1827 = vmul.f32 %v1800, %v1824
        %v1828 = vmul.f32 %v1805, %v1824
        %v1829 = vadd.f32 %v1001, %v1825
        %v1830 = vadd.f32 %v1002, %v1826
        %v1831 = vadd.f32 %v1003, %v1827
        %v1832 = vadd.f32 %v1004, %v1828
        %vm1833 = vcmp.ge.f32.partialorder %v1817, 0.0
        %vm1834 = vcmp.ge.f32.partialorder %v1818, 0.0
        %vm1835 = vcmp.ge.f32.partialorder %v1819, 0.0
        %vm1836 = vcmp.ge.f32.partialorder %v1820, 0.0
        %v1837 = vmul.f32 %v1817, 0.01
        %v1838 = vmul.f32 %v1818, 0.01
        %v1839 = vmul.f32 %v1819, 0.01
        %v1840 = vmul.f32 %v1820, 0.01
        %v1841 = vsel %vm1833, %v1817, %v1837
        %v1842 = vsel %vm1834, %v1818, %v1838
        %v1843 = vsel %vm1835, %v1819, %v1839
        %v1844 = vsel %vm1836, %v1820, %v1840
        %v1845 = vsub.f32 %v1841, %v1829
        %v1846 = vsub.f32 %v1842, %v1830
        %v1847 = vsub.f32 %v1843, %v1831
        %v1848 = vsub.f32 %v1844, %v1832
        %1850 = vset.pattern.permute.xlu0 2
        %1851 = vperm.xlu0 %1850, %v1845
        %v1852 = vpop.permute.xlu0 %1851
        %1855 = vset.pattern.permute.xlu0 2
        %1856 = vperm.xlu0 %1855, %v1846
        %v1857 = vpop.permute.xlu0 %1856
        %1860 = vset.pattern.permute.xlu0 2
        %1861 = vperm.xlu0 %1860, %v1847
        %v1862 = vpop.permute.xlu0 %1861
        %1865 = vset.pattern.permute.xlu0 2
        %1866 = vperm.xlu0 %1865, %v1848
        %v1867 = vpop.permute.xlu0 %1866
        %v1869 = vld [vmem:[#allocation5 + $0x8a] sm:$0x1]
        %v1870 = vld [vmem:[#allocation5 + $0x10a] sm:$0x1]
        %v1871 = vlaneseq
        %v1872 = vshrl.u32 %v1871, 7
        %v1873 = vsub.s32 0, %v1872
        %v1874 = vrot.slane %v1869, %v1873
        %v1875 = vmul.f32 %v1852, %v1874
        %v1876 = vmul.f32 %v1857, %v1874
        %v1877 = vmul.f32 %v1862, %v1874
        %v1878 = vmul.f32 %v1867, %v1874
        %v1879 = vadd.f32 %v1817, %v1875
        %v1880 = vadd.f32 %v1818, %v1876
        %v1881 = vadd.f32 %v1819, %v1877
        %v1882 = vadd.f32 %v1820, %v1878
        %v1883 = vlaneseq
        %v1884 = vshrl.u32 %v1883, 7
        %v1885 = vsub.s32 0, %v1884
        %v1886 = vrot.slane %v1870, %v1885
        %v1887 = vmul.f32 %v1852, %v1886
        %v1888 = vmul.f32 %v1857, %v1886
        %v1889 = vmul.f32 %v1862, %v1886
        %v1890 = vmul.f32 %v1867, %v1886
        %v1891 = vadd.f32 %v1829, %v1887
        %v1892 = vadd.f32 %v1830, %v1888
        %v1893 = vadd.f32 %v1831, %v1889
        %v1894 = vadd.f32 %v1832, %v1890
        %v1895 = vsub.f32 %v1879, %v1891
        %v1896 = vsub.f32 %v1880, %v1892
        %v1897 = vsub.f32 %v1881, %v1893
        %v1898 = vsub.f32 %v1882, %v1894
        %1900 = vset.pattern.permute.xlu0 3
        %1901 = vperm.xlu0 %1900, %v1895
        %v1902 = vpop.permute.xlu0 %1901
        %1905 = vset.pattern.permute.xlu0 3
        %1906 = vperm.xlu0 %1905, %v1896
        %v1907 = vpop.permute.xlu0 %1906
        %1910 = vset.pattern.permute.xlu0 3
        %1911 = vperm.xlu0 %1910, %v1897
        %v1912 = vpop.permute.xlu0 %1911
        %1915 = vset.pattern.permute.xlu0 3
        %1916 = vperm.xlu0 %1915, %v1898
        %v1917 = vpop.permute.xlu0 %1916
        %v1919 = vld [vmem:[#allocation5 + $0x8b] sm:$0x1]
        %v1920 = vld [vmem:[#allocation5 + $0x10b] sm:$0x1]
        %v1921 = vlaneseq
        %v1922 = vshrl.u32 %v1921, 7
        %v1923 = vsub.s32 0, %v1922
        %v1924 = vrot.slane %v1919, %v1923
        %v1925 = vmul.f32 %v1902, %v1924
        %v1926 = vmul.f32 %v1907, %v1924
        %v1927 = vmul.f32 %v1912, %v1924
        %v1928 = vmul.f32 %v1917, %v1924
        %v1929 = vadd.f32 %v1879, %v1925
        %v1930 = vadd.f32 %v1880, %v1926
        %v1931 = vadd.f32 %v1881, %v1927
        %v1932 = vadd.f32 %v1882, %v1928
        %v1933 = vlaneseq
        %v1934 = vshrl.u32 %v1933, 7
        %v1935 = vsub.s32 0, %v1934
        %v1936 = vrot.slane %v1920, %v1935
        %v1937 = vmul.f32 %v1902, %v1936
        %v1938 = vmul.f32 %v1907, %v1936
        %v1939 = vmul.f32 %v1912, %v1936
        %v1940 = vmul.f32 %v1917, %v1936
        %v1941 = vadd.f32 %v1891, %v1937
        %v1942 = vadd.f32 %v1892, %v1938
        %v1943 = vadd.f32 %v1893, %v1939
        %v1944 = vadd.f32 %v1894, %v1940
        %v1945 = vand.u32 2147483647, %v1929
        %vm1946 = vcmp.le.f32.partialorder %v1945, 0.7853982
        %vm1947 = vcmp.lt.s32.totalorder %v1929, 0
        %v1948 = vand.u32 %v1929, 2139095040
        %v1949 = vshrl.u32 %v1948, 23
        %v1950 = vsub.s32 %v1949, 127
        %v1951 = vand.u32 2147483647, %v1929
        %v1952 = vand.u32 %v1951, 8388607
        %v1953 = vor.u32 %v1952, 8388608
        %v1954 = vsub.s32 0, %v1953
        %v1955 = vadd.s32 %v1950, 1
        %vm1956 = vcmp.gt.s32.totalorder %v1955, 0
        %v1957 = vsel %vm1956, %v1955, 0
        %v1958 = vshrl.u32 %v1957, 5
        %v1959 = vand.u32 %v1957, 31
        %v1960 = vsub.s32 32, %v1959
        %v1961 = vshrl.u32 683565275, %v1960
        %v1962 = vshll.u32 683565275, %v1959
        %v1963 = vshrl.u32 2475754826, %v1960
        %v1964 = vor.u32 %v1962, %v1963
        %v1965 = vshll.u32 2475754826, %v1959
        %v1966 = vshrl.u32 2131351028, %v1960
        %v1967 = vor.u32 %v1965, %v1966
        %v1968 = vshll.u32 2131351028, %v1959
        %v1969 = vshrl.u32 2102212464, %v1960
        %v1970 = vor.u32 %v1968, %v1969
        %v1971 = vshll.u32 2102212464, %v1959
        %v1972 = vshrl.u32 920167782, %v1960
        %v1973 = vor.u32 %v1971, %v1972
        %v1974 = vshll.u32 920167782, %v1959
        %v1975 = vshrl.u32 1326507024, %v1960
        %v1976 = vor.u32 %v1974, %v1975
        %vm1977 = vcmp.lt.s32.totalorder %v1958, 1
        %vm1978 = vcmp.lt.s32.totalorder %v1958, 2
        %vm1979 = vcmp.lt.s32.totalorder %v1958, 3
        %vm1980 = vcmp.lt.s32.totalorder %v1958, 4
        %v1981 = vsel %vm1977, %v1961, %v1964
        %v1982 = vsel %vm1980, %v1970, 2102212464
        %v1983 = vsel %vm1979, %v1967, %v1982
        %v1984 = vsel %vm1978, %v1981, %v1983
        %v1985 = vsel %vm1977, %v1964, %v1967
        %v1986 = vsel %vm1980, %v1973, 920167782
        %v1987 = vsel %vm1979, %v1970, %v1986
        %v1988 = vsel %vm1978, %v1985, %v1987
        %v1989 = vsel %vm1977, %v1967, %v1970
        %v1990 = vsel %vm1980, %v1976, 1326507024
        %v1991 = vsel %vm1979, %v1973, %v1990
        %v1992 = vsel %vm1978, %v1989, %v1991
        %v1993 = vshll.u32 %v1953, 8
        %v1994 = vmul.u32.u64.compose %v1993, %v1992
        %v1995 = vextract.low.u32 %v1994
        %v1996 = vextract.high.u32 %v1994
        %v1997 = vmul.u32.u64.compose %v1993, %v1988
        %v1998 = vextract.low.u32 %v1997
        %v1999 = vextract.high.u32 %v1997
        %v2000 = vmul.u32 %v1993, %v1984
        %v2001 = vadd.s32 %v1996, %v1998
        %vm2002 = vc.u32 %v1996, %v1998
        %v2003 = vadd.s32 %v1999, 1
        %v2004 = vsel %vm2002, %v2003, %v1999
        %v2005 = vadd.s32 %v2000, %v2004
        %v2006 = vadd.s32 %v2005, 536870912
        %v2007 = vshrl.u32 %v2006, 30
        %v2008 = vshll.u32 %v2007, 30
        %v2009 = vsub.s32 %v2005, %v2008
        %vm2010 = vcmp.lt.s32.totalorder %v2009, 0
        %v2011 = vsub.s32 0, %v2009
        %v2012 = vsel %vm2010, %v2011, %v2009
        %v2013 = vclz %v2012
        %v2014 = vsub.s32 %v2013, 2
        %vm2015 = vcmp.gt.s32.totalorder 0, %v2014
        %v2016 = vsel %vm2015, 0, %v2014
        %v2017 = vsub.s32 32, %v2016
        %v2018 = vshll.u32 %v2009, %v2016
        %v2019 = vshrl.u32 %v2001, %v2017
        %v2020 = vor.u32 %v2018, %v2019
        %v2021 = vsub.s32 4294967266, %v2016
        %v2022 = vadd.s32 %v2021, 127
        %v2023 = vshll.u32 %v2022, 23
        %v2024 = vor.u32 4788187, %v2023
        %v2025 = vand.u32 2147483647, %v2024
        %v2027 = vcvt.s32.f32 %v2020
        %v2028 = vmul.f32 %v2027, %v2025
        %v2029 = vxor.u32 %v2028, 2147483648
        %v2030 = vsel %vm1947, %v2029, %v2028
        %v2031 = vsub.s32 4, %v2007
        %v2032 = vsel %vm1947, %v2031, %v2007
        %v2033 = vsel %vm1946, %v1929, %v2030
        %v2034 = vsel %vm1946, 0, %v2032
        %v2035 = vcosq.f32.pop %v2033
        %v2036 = vsinq.f32.pop %v2033
        %vm2037 = vweird.f32 %v1929
        %v2038 = vadd.s32 %v2034, 3
        %v2039 = vand.u32 %v2038, 3
        %vm2040 = vcmp.lt.s32.totalorder %v2039, 2
        %vm2041 = vcmp.eq.s32.totalorder %v2039, 0
        %v2042 = vxor.u32 %v2036, 2147483648
        %v2043 = vsel %vm2041, %v2035, %v2042
        %vm2044 = vcmp.eq.s32.totalorder %v2039, 2
        %v2045 = vxor.u32 %v2035, 2147483648
        %v2046 = vsel %vm2044, %v2045, %v2036
        %v2047 = vsel %vm2040, %v2043, %v2046
        %v2048 = vsel %vm2037, nan, %v2047
        %v2049 = vand.u32 2147483647, %v1930
        %vm2050 = vcmp.le.f32.partialorder %v2049, 0.7853982
        %vm2051 = vcmp.lt.s32.totalorder %v1930, 0
        %v2052 = vand.u32 %v1930, 2139095040
        %v2053 = vshrl.u32 %v2052, 23
        %v2054 = vsub.s32 %v2053, 127
        %v2055 = vand.u32 2147483647, %v1930
        %v2056 = vand.u32 %v2055, 8388607
        %v2057 = vor.u32 %v2056, 8388608
        %v2058 = vsub.s32 0, %v2057
        %v2059 = vadd.s32 %v2054, 1
        %vm2060 = vcmp.gt.s32.totalorder %v2059, 0
        %v2061 = vsel %vm2060, %v2059, 0
        %v2062 = vshrl.u32 %v2061, 5
        %v2063 = vand.u32 %v2061, 31
        %v2064 = vsub.s32 32, %v2063
        %v2065 = vshrl.u32 683565275, %v2064
        %v2066 = vshll.u32 683565275, %v2063
        %v2067 = vshrl.u32 2475754826, %v2064
        %v2068 = vor.u32 %v2066, %v2067
        %v2069 = vshll.u32 2475754826, %v2063
        %v2070 = vshrl.u32 2131351028, %v2064
        %v2071 = vor.u32 %v2069, %v2070
        %v2072 = vshll.u32 2131351028, %v2063
        %v2073 = vshrl.u32 2102212464, %v2064
        %v2074 = vor.u32 %v2072, %v2073
        %v2075 = vshll.u32 2102212464, %v2063
        %v2076 = vshrl.u32 920167782, %v2064
        %v2077 = vor.u32 %v2075, %v2076
        %v2078 = vshll.u32 920167782, %v2063
        %v2079 = vshrl.u32 1326507024, %v2064
        %v2080 = vor.u32 %v2078, %v2079
        %vm2081 = vcmp.lt.s32.totalorder %v2062, 1
        %vm2082 = vcmp.lt.s32.totalorder %v2062, 2
        %vm2083 = vcmp.lt.s32.totalorder %v2062, 3
        %vm2084 = vcmp.lt.s32.totalorder %v2062, 4
        %v2085 = vsel %vm2081, %v2065, %v2068
        %v2086 = vsel %vm2084, %v2074, 2102212464
        %v2087 = vsel %vm2083, %v2071, %v2086
        %v2088 = vsel %vm2082, %v2085, %v2087
        %v2089 = vsel %vm2081, %v2068, %v2071
        %v2090 = vsel %vm2084, %v2077, 920167782
        %v2091 = vsel %vm2083, %v2074, %v2090
        %v2092 = vsel %vm2082, %v2089, %v2091
        %v2093 = vsel %vm2081, %v2071, %v2074
        %v2094 = vsel %vm2084, %v2080, 1326507024
        %v2095 = vsel %vm2083, %v2077, %v2094
        %v2096 = vsel %vm2082, %v2093, %v2095
        %v2097 = vshll.u32 %v2057, 8
        %v2098 = vmul.u32.u64.compose %v2097, %v2096
        %v2099 = vextract.low.u32 %v2098
        %v2100 = vextract.high.u32 %v2098
        %v2101 = vmul.u32.u64.compose %v2097, %v2092
        %v2102 = vextract.low.u32 %v2101
        %v2103 = vextract.high.u32 %v2101
        %v2104 = vmul.u32 %v2097, %v2088
        %v2105 = vadd.s32 %v2100, %v2102
        %vm2106 = vc.u32 %v2100, %v2102
        %v2107 = vadd.s32 %v2103, 1
        %v2108 = vsel %vm2106, %v2107, %v2103
        %v2109 = vadd.s32 %v2104, %v2108
        %v2110 = vadd.s32 %v2109, 536870912
        %v2111 = vshrl.u32 %v2110, 30
        %v2112 = vshll.u32 %v2111, 30
        %v2113 = vsub.s32 %v2109, %v2112
        %vm2114 = vcmp.lt.s32.totalorder %v2113, 0
        %v2115 = vsub.s32 0, %v2113
        %v2116 = vsel %vm2114, %v2115, %v2113
        %v2117 = vclz %v2116
        %v2118 = vsub.s32 %v2117, 2
        %vm2119 = vcmp.gt.s32.totalorder 0, %v2118
        %v2120 = vsel %vm2119, 0, %v2118
        %v2121 = vsub.s32 32, %v2120
        %v2122 = vshll.u32 %v2113, %v2120
        %v2123 = vshrl.u32 %v2105, %v2121
        %v2124 = vor.u32 %v2122, %v2123
        %v2125 = vsub.s32 4294967266, %v2120
        %v2126 = vadd.s32 %v2125, 127
        %v2127 = vshll.u32 %v2126, 23
        %v2128 = vor.u32 4788187, %v2127
        %v2129 = vand.u32 2147483647, %v2128
        %v2131 = vcvt.s32.f32 %v2124
        %v2132 = vmul.f32 %v2131, %v2129
        %v2133 = vxor.u32 %v2132, 2147483648
        %v2134 = vsel %vm2051, %v2133, %v2132
        %v2135 = vsub.s32 4, %v2111
        %v2136 = vsel %vm2051, %v2135, %v2111
        %v2137 = vsel %vm2050, %v1930, %v2134
        %v2138 = vsel %vm2050, 0, %v2136
        %v2139 = vcosq.f32.pop %v2137
        %v2140 = vsinq.f32.pop %v2137
        %vm2141 = vweird.f32 %v1930
        %v2142 = vadd.s32 %v2138, 3
        %v2143 = vand.u32 %v2142, 3
        %vm2144 = vcmp.lt.s32.totalorder %v2143, 2
        %vm2145 = vcmp.eq.s32.totalorder %v2143, 0
        %v2146 = vxor.u32 %v2140, 2147483648
        %v2147 = vsel %vm2145, %v2139, %v2146
        %vm2148 = vcmp.eq.s32.totalorder %v2143, 2
        %v2149 = vxor.u32 %v2139, 2147483648
        %v2150 = vsel %vm2148, %v2149, %v2140
        %v2151 = vsel %vm2144, %v2147, %v2150
        %v2152 = vsel %vm2141, nan, %v2151
        %v2153 = vand.u32 2147483647, %v1931
        %vm2154 = vcmp.le.f32.partialorder %v2153, 0.7853982
        %vm2155 = vcmp.lt.s32.totalorder %v1931, 0
        %v2156 = vand.u32 %v1931, 2139095040
        %v2157 = vshrl.u32 %v2156, 23
        %v2158 = vsub.s32 %v2157, 127
        %v2159 = vand.u32 2147483647, %v1931
        %v2160 = vand.u32 %v2159, 8388607
        %v2161 = vor.u32 %v2160, 8388608
        %v2162 = vsub.s32 0, %v2161
        %v2163 = vadd.s32 %v2158, 1
        %vm2164 = vcmp.gt.s32.totalorder %v2163, 0
        %v2165 = vsel %vm2164, %v2163, 0
        %v2166 = vshrl.u32 %v2165, 5
        %v2167 = vand.u32 %v2165, 31
        %v2168 = vsub.s32 32, %v2167
        %v2169 = vshrl.u32 683565275, %v2168
        %v2170 = vshll.u32 683565275, %v2167
        %v2171 = vshrl.u32 2475754826, %v2168
        %v2172 = vor.u32 %v2170, %v2171
        %v2173 = vshll.u32 2475754826, %v2167
        %v2174 = vshrl.u32 2131351028, %v2168
        %v2175 = vor.u32 %v2173, %v2174
        %v2176 = vshll.u32 2131351028, %v2167
        %v2177 = vshrl.u32 2102212464, %v2168
        %v2178 = vor.u32 %v2176, %v2177
        %v2179 = vshll.u32 2102212464, %v2167
        %v2180 = vshrl.u32 920167782, %v2168
        %v2181 = vor.u32 %v2179, %v2180
        %v2182 = vshll.u32 920167782, %v2167
        %v2183 = vshrl.u32 1326507024, %v2168
        %v2184 = vor.u32 %v2182, %v2183
        %vm2185 = vcmp.lt.s32.totalorder %v2166, 1
        %vm2186 = vcmp.lt.s32.totalorder %v2166, 2
        %vm2187 = vcmp.lt.s32.totalorder %v2166, 3
        %vm2188 = vcmp.lt.s32.totalorder %v2166, 4
        %v2189 = vsel %vm2185, %v2169, %v2172
        %v2190 = vsel %vm2188, %v2178, 2102212464
        %v2191 = vsel %vm2187, %v2175, %v2190
        %v2192 = vsel %vm2186, %v2189, %v2191
        %v2193 = vsel %vm2185, %v2172, %v2175
        %v2194 = vsel %vm2188, %v2181, 920167782
        %v2195 = vsel %vm2187, %v2178, %v2194
        %v2196 = vsel %vm2186, %v2193, %v2195
        %v2197 = vsel %vm2185, %v2175, %v2178
        %v2198 = vsel %vm2188, %v2184, 1326507024
        %v2199 = vsel %vm2187, %v2181, %v2198
        %v2200 = vsel %vm2186, %v2197, %v2199
        %v2201 = vshll.u32 %v2161, 8
        %v2202 = vmul.u32.u64.compose %v2201, %v2200
        %v2203 = vextract.low.u32 %v2202
        %v2204 = vextract.high.u32 %v2202
        %v2205 = vmul.u32.u64.compose %v2201, %v2196
        %v2206 = vextract.low.u32 %v2205
        %v2207 = vextract.high.u32 %v2205
        %v2208 = vmul.u32 %v2201, %v2192
        %v2209 = vadd.s32 %v2204, %v2206
        %vm2210 = vc.u32 %v2204, %v2206
        %v2211 = vadd.s32 %v2207, 1
        %v2212 = vsel %vm2210, %v2211, %v2207
        %v2213 = vadd.s32 %v2208, %v2212
        %v2214 = vadd.s32 %v2213, 536870912
        %v2215 = vshrl.u32 %v2214, 30
        %v2216 = vshll.u32 %v2215, 30
        %v2217 = vsub.s32 %v2213, %v2216
        %vm2218 = vcmp.lt.s32.totalorder %v2217, 0
        %v2219 = vsub.s32 0, %v2217
        %v2220 = vsel %vm2218, %v2219, %v2217
        %v2221 = vclz %v2220
        %v2222 = vsub.s32 %v2221, 2
        %vm2223 = vcmp.gt.s32.totalorder 0, %v2222
        %v2224 = vsel %vm2223, 0, %v2222
        %v2225 = vsub.s32 32, %v2224
        %v2226 = vshll.u32 %v2217, %v2224
        %v2227 = vshrl.u32 %v2209, %v2225
        %v2228 = vor.u32 %v2226, %v2227
        %v2229 = vsub.s32 4294967266, %v2224
        %v2230 = vadd.s32 %v2229, 127
        %v2231 = vshll.u32 %v2230, 23
        %v2232 = vor.u32 4788187, %v2231
        %v2233 = vand.u32 2147483647, %v2232
        %v2235 = vcvt.s32.f32 %v2228
        %v2236 = vmul.f32 %v2235, %v2233
        %v2237 = vxor.u32 %v2236, 2147483648
        %v2238 = vsel %vm2155, %v2237, %v2236
        %v2239 = vsub.s32 4, %v2215
        %v2240 = vsel %vm2155, %v2239, %v2215
        %v2241 = vsel %vm2154, %v1931, %v2238
        %v2242 = vsel %vm2154, 0, %v2240
        %v2243 = vcosq.f32.pop %v2241
        %v2244 = vsinq.f32.pop %v2241
        %vm2245 = vweird.f32 %v1931
        %v2246 = vadd.s32 %v2242, 3
        %v2247 = vand.u32 %v2246, 3
        %vm2248 = vcmp.lt.s32.totalorder %v2247, 2
        %vm2249 = vcmp.eq.s32.totalorder %v2247, 0
        %v2250 = vxor.u32 %v2244, 2147483648
        %v2251 = vsel %vm2249, %v2243, %v2250
        %vm2252 = vcmp.eq.s32.totalorder %v2247, 2
        %v2253 = vxor.u32 %v2243, 2147483648
        %v2254 = vsel %vm2252, %v2253, %v2244
        %v2255 = vsel %vm2248, %v2251, %v2254
        %v2256 = vsel %vm2245, nan, %v2255
        %v2257 = vand.u32 2147483647, %v1932
        %vm2258 = vcmp.le.f32.partialorder %v2257, 0.7853982
        %vm2259 = vcmp.lt.s32.totalorder %v1932, 0
        %v2260 = vand.u32 %v1932, 2139095040
        %v2261 = vshrl.u32 %v2260, 23
        %v2262 = vsub.s32 %v2261, 127
        %v2263 = vand.u32 2147483647, %v1932
        %v2264 = vand.u32 %v2263, 8388607
        %v2265 = vor.u32 %v2264, 8388608
        %v2266 = vsub.s32 0, %v2265
        %v2267 = vadd.s32 %v2262, 1
        %vm2268 = vcmp.gt.s32.totalorder %v2267, 0
        %v2269 = vsel %vm2268, %v2267, 0
        %v2270 = vshrl.u32 %v2269, 5
        %v2271 = vand.u32 %v2269, 31
        %v2272 = vsub.s32 32, %v2271
        %v2273 = vshrl.u32 683565275, %v2272
        %v2274 = vshll.u32 683565275, %v2271
        %v2275 = vshrl.u32 2475754826, %v2272
        %v2276 = vor.u32 %v2274, %v2275
        %v2277 = vshll.u32 2475754826, %v2271
        %v2278 = vshrl.u32 2131351028, %v2272
        %v2279 = vor.u32 %v2277, %v2278
        %v2280 = vshll.u32 2131351028, %v2271
        %v2281 = vshrl.u32 2102212464, %v2272
        %v2282 = vor.u32 %v2280, %v2281
        %v2283 = vshll.u32 2102212464, %v2271
        %v2284 = vshrl.u32 920167782, %v2272
        %v2285 = vor.u32 %v2283, %v2284
        %v2286 = vshll.u32 920167782, %v2271
        %v2287 = vshrl.u32 1326507024, %v2272
        %v2288 = vor.u32 %v2286, %v2287
        %vm2289 = vcmp.lt.s32.totalorder %v2270, 1
        %vm2290 = vcmp.lt.s32.totalorder %v2270, 2
        %vm2291 = vcmp.lt.s32.totalorder %v2270, 3
        %vm2292 = vcmp.lt.s32.totalorder %v2270, 4
        %v2293 = vsel %vm2289, %v2273, %v2276
        %v2294 = vsel %vm2292, %v2282, 2102212464
        %v2295 = vsel %vm2291, %v2279, %v2294
        %v2296 = vsel %vm2290, %v2293, %v2295
        %v2297 = vsel %vm2289, %v2276, %v2279
        %v2298 = vsel %vm2292, %v2285, 920167782
        %v2299 = vsel %vm2291, %v2282, %v2298
        %v2300 = vsel %vm2290, %v2297, %v2299
        %v2301 = vsel %vm2289, %v2279, %v2282
        %v2302 = vsel %vm2292, %v2288, 1326507024
        %v2303 = vsel %vm2291, %v2285, %v2302
        %v2304 = vsel %vm2290, %v2301, %v2303
        %v2305 = vshll.u32 %v2265, 8
        %v2306 = vmul.u32.u64.compose %v2305, %v2304
        %v2307 = vextract.low.u32 %v2306
        %v2308 = vextract.high.u32 %v2306
        %v2309 = vmul.u32.u64.compose %v2305, %v2300
        %v2310 = vextract.low.u32 %v2309
        %v2311 = vextract.high.u32 %v2309
        %v2312 = vmul.u32 %v2305, %v2296
        %v2313 = vadd.s32 %v2308, %v2310
        %vm2314 = vc.u32 %v2308, %v2310
        %v2315 = vadd.s32 %v2311, 1
        %v2316 = vsel %vm2314, %v2315, %v2311
        %v2317 = vadd.s32 %v2312, %v2316
        %v2318 = vadd.s32 %v2317, 536870912
        %v2319 = vshrl.u32 %v2318, 30
        %v2320 = vshll.u32 %v2319, 30
        %v2321 = vsub.s32 %v2317, %v2320
        %vm2322 = vcmp.lt.s32.totalorder %v2321, 0
        %v2323 = vsub.s32 0, %v2321
        %v2324 = vsel %vm2322, %v2323, %v2321
        %v2325 = vclz %v2324
        %v2326 = vsub.s32 %v2325, 2
        %vm2327 = vcmp.gt.s32.totalorder 0, %v2326
        %v2328 = vsel %vm2327, 0, %v2326
        %v2329 = vsub.s32 32, %v2328
        %v2330 = vshll.u32 %v2321, %v2328
        %v2331 = vshrl.u32 %v2313, %v2329
        %v2332 = vor.u32 %v2330, %v2331
        %v2333 = vsub.s32 4294967266, %v2328
        %v2334 = vadd.s32 %v2333, 127
        %v2335 = vshll.u32 %v2334, 23
        %v2336 = vor.u32 4788187, %v2335
        %v2337 = vand.u32 2147483647, %v2336
        %v2339 = vcvt.s32.f32 %v2332
        %v2340 = vmul.f32 %v2339, %v2337
        %v2341 = vxor.u32 %v2340, 2147483648
        %v2342 = vsel %vm2259, %v2341, %v2340
        %v2343 = vsub.s32 4, %v2319
        %v2344 = vsel %vm2259, %v2343, %v2319
        %v2345 = vsel %vm2258, %v1932, %v2342
        %v2346 = vsel %vm2258, 0, %v2344
        %v2347 = vcosq.f32.pop %v2345
        %v2348 = vsinq.f32.pop %v2345
        %vm2349 = vweird.f32 %v1932
        %v2350 = vadd.s32 %v2346, 3
        %v2351 = vand.u32 %v2350, 3
        %vm2352 = vcmp.lt.s32.totalorder %v2351, 2
        %vm2353 = vcmp.eq.s32.totalorder %v2351, 0
        %v2354 = vxor.u32 %v2348, 2147483648
        %v2355 = vsel %vm2353, %v2347, %v2354
        %vm2356 = vcmp.eq.s32.totalorder %v2351, 2
        %v2357 = vxor.u32 %v2347, 2147483648
        %v2358 = vsel %vm2356, %v2357, %v2348
        %v2359 = vsel %vm2352, %v2355, %v2358
        %v2360 = vsel %vm2349, nan, %v2359
        %v2361 = vsub.f32 %v2048, %v1941
        %v2362 = vsub.f32 %v2152, %v1942
        %v2363 = vsub.f32 %v2256, %v1943
        %v2364 = vsub.f32 %v2360, %v1944
        %2366 = vset.pattern.permute.xlu0 4
        %2367 = vperm.xlu0 %2366, %v2361
        %v2368 = vpop.permute.xlu0 %2367
        %2371 = vset.pattern.permute.xlu0 4
        %2372 = vperm.xlu0 %2371, %v2362
        %v2373 = vpop.permute.xlu0 %2372
        %2376 = vset.pattern.permute.xlu0 4
        %2377 = vperm.xlu0 %2376, %v2363
        %v2378 = vpop.permute.xlu0 %2377
        %2381 = vset.pattern.permute.xlu0 4
        %2382 = vperm.xlu0 %2381, %v2364
        %v2383 = vpop.permute.xlu0 %2382
        %v2385 = vld [vmem:[#allocation5 + $0x8c] sm:$0x1]
        %v2386 = vld [vmem:[#allocation5 + $0x10c] sm:$0x1]
        %v2387 = vlaneseq
        %v2388 = vshrl.u32 %v2387, 7
        %v2389 = vsub.s32 0, %v2388
        %v2390 = vrot.slane %v2385, %v2389
        %v2391 = vmul.f32 %v2368, %v2390
        %v2392 = vmul.f32 %v2373, %v2390
        %v2393 = vmul.f32 %v2378, %v2390
        %v2394 = vmul.f32 %v2383, %v2390
        %v2395 = vadd.f32 %v1929, %v2391
        %v2396 = vadd.f32 %v1930, %v2392
        %v2397 = vadd.f32 %v1931, %v2393
        %v2398 = vadd.f32 %v1932, %v2394
        %v2399 = vlaneseq
        %v2400 = vshrl.u32 %v2399, 7
        %v2401 = vsub.s32 0, %v2400
        %v2402 = vrot.slane %v2386, %v2401
        %v2403 = vmul.f32 %v2368, %v2402
        %v2404 = vmul.f32 %v2373, %v2402
        %v2405 = vmul.f32 %v2378, %v2402
        %v2406 = vmul.f32 %v2383, %v2402
        %v2407 = vadd.f32 %v1941, %v2403
        %v2408 = vadd.f32 %v1942, %v2404
        %v2409 = vadd.f32 %v1943, %v2405
        %v2410 = vadd.f32 %v1944, %v2406
        %v2411 = vmax.f32 %v2395, 0.0
        %v2412 = vmax.f32 %v2396, 0.0
        %v2413 = vmax.f32 %v2397, 0.0
        %v2414 = vmax.f32 %v2398, 0.0
        %v2415 = vand.u32 2147483647, %v2395
        %v2416 = vand.u32 2147483647, %v2396
        %v2417 = vand.u32 2147483647, %v2397
        %v2418 = vand.u32 2147483647, %v2398
        %v2419 = vsub.f32 0.0, %v2415
        %v2420 = vsub.f32 0.0, %v2416
        %v2421 = vsub.f32 0.0, %v2417
        %v2422 = vsub.f32 0.0, %v2418
        %v2423 = vmul.f32 %v2419, 1.442695
        %v2424 = vpow.pop %v2423
        %v2425 = vmul.f32 %v2420, 1.442695
        %v2426 = vpow.pop %v2425
        %v2427 = vmul.f32 %v2421, 1.442695
        %v2428 = vpow.pop %v2427
        %v2429 = vmul.f32 %v2422, 1.442695
        %v2430 = vpow.pop %v2429
        %v2431 = vadd.f32 %v2424, 1.0
        %v2432 = vadd.f32 %v2426, 1.0
        %v2433 = vadd.f32 %v2428, 1.0
        %v2434 = vadd.f32 %v2430, 1.0
        %v2435 = vlog2.pop %v2431
        %v2436 = vmul.f32 %v2435, 0.6931472
        %v2437 = vlog2.pop %v2432
        %v2438 = vmul.f32 %v2437, 0.6931472
        %v2439 = vlog2.pop %v2433
        %v2440 = vmul.f32 %v2439, 0.6931472
        %v2441 = vlog2.pop %v2434
        %v2442 = vmul.f32 %v2441, 0.6931472
        %v2443 = vadd.f32 %v2411, %v2436
        %v2444 = vadd.f32 %v2412, %v2438
        %v2445 = vadd.f32 %v2413, %v2440
        %v2446 = vadd.f32 %v2414, %v2442
        %v2447 = vsub.f32 %v2443, %v2407
        %v2448 = vsub.f32 %v2444, %v2408
        %v2449 = vsub.f32 %v2445, %v2409
        %v2450 = vsub.f32 %v2446, %v2410
        %2452 = vset.pattern.permute.xlu0 5
        %2453 = vperm.xlu0 %2452, %v2447
        %v2454 = vpop.permute.xlu0 %2453
        %2457 = vset.pattern.permute.xlu0 5
        %2458 = vperm.xlu0 %2457, %v2448
        %v2459 = vpop.permute.xlu0 %2458
        %2462 = vset.pattern.permute.xlu0 5
        %2463 = vperm.xlu0 %2462, %v2449
        %v2464 = vpop.permute.xlu0 %2463
        %2467 = vset.pattern.permute.xlu0 5
        %2468 = vperm.xlu0 %2467, %v2450
        %v2469 = vpop.permute.xlu0 %2468
        %v2471 = vld [vmem:[#allocation5 + $0x8d] sm:$0x1]
        %v2472 = vld [vmem:[#allocation5 + $0x10d] sm:$0x1]
        %v2473 = vlaneseq
        %v2474 = vshrl.u32 %v2473, 7
        %v2475 = vsub.s32 0, %v2474
        %v2476 = vrot.slane %v2471, %v2475
        %v2477 = vmul.f32 %v2454, %v2476
        %v2478 = vmul.f32 %v2459, %v2476
        %v2479 = vmul.f32 %v2464, %v2476
        %v2480 = vmul.f32 %v2469, %v2476
        %v2481 = vadd.f32 %v2395, %v2477
        %v2482 = vadd.f32 %v2396, %v2478
        %v2483 = vadd.f32 %v2397, %v2479
        %v2484 = vadd.f32 %v2398, %v2480
        %v2485 = vlaneseq
        %v2486 = vshrl.u32 %v2485, 7
        %v2487 = vsub.s32 0, %v2486
        %v2488 = vrot.slane %v2472, %v2487
        %v2489 = vmul.f32 %v2454, %v2488
        %v2490 = vmul.f32 %v2459, %v2488
        %v2491 = vmul.f32 %v2464, %v2488
        %v2492 = vmul.f32 %v2469, %v2488
        %v2493 = vadd.f32 %v2407, %v2489
        %v2494 = vadd.f32 %v2408, %v2490
        %v2495 = vadd.f32 %v2409, %v2491
        %v2496 = vadd.f32 %v2410, %v2492
        %v2497 = vsub.f32 0.0, %v2481
        %v2498 = vsub.f32 0.0, %v2482
        %v2499 = vsub.f32 0.0, %v2483
        %v2500 = vsub.f32 0.0, %v2484
        %v2501 = vmax.f32 %v2497, 0.0
        %v2502 = vmax.f32 %v2498, 0.0
        %v2503 = vmax.f32 %v2499, 0.0
        %v2504 = vmax.f32 %v2500, 0.0
        %v2505 = vand.u32 2147483647, %v2497
        %v2506 = vand.u32 2147483647, %v2498
        %v2507 = vand.u32 2147483647, %v2499
        %v2508 = vand.u32 2147483647, %v2500
        %v2509 = vsub.f32 0.0, %v2505
        %v2510 = vsub.f32 0.0, %v2506
        %v2511 = vsub.f32 0.0, %v2507
        %v2512 = vsub.f32 0.0, %v2508
        %v2513 = vmul.f32 %v2509, 1.442695
        %v2514 = vpow.pop %v2513
        %v2515 = vmul.f32 %v2510, 1.442695
        %v2516 = vpow.pop %v2515
        %v2517 = vmul.f32 %v2511, 1.442695
        %v2518 = vpow.pop %v2517
        %v2519 = vmul.f32 %v2512, 1.442695
        %v2520 = vpow.pop %v2519
        %v2521 = vadd.f32 %v2514, 1.0
        %v2522 = vadd.f32 %v2516, 1.0
        %v2523 = vadd.f32 %v2518, 1.0
        %v2524 = vadd.f32 %v2520, 1.0
        %v2525 = vlog2.pop %v2521
        %v2526 = vmul.f32 %v2525, 0.6931472
        %v2527 = vlog2.pop %v2522
        %v2528 = vmul.f32 %v2527, 0.6931472
        %v2529 = vlog2.pop %v2523
        %v2530 = vmul.f32 %v2529, 0.6931472
        %v2531 = vlog2.pop %v2524
        %v2532 = vmul.f32 %v2531, 0.6931472
        %v2533 = vadd.f32 %v2501, %v2526
        %v2534 = vadd.f32 %v2502, %v2528
        %v2535 = vadd.f32 %v2503, %v2530
        %v2536 = vadd.f32 %v2504, %v2532
        %v2537 = vsub.f32 0.0, %v2533
        %v2538 = vsub.f32 0.0, %v2534
        %v2539 = vsub.f32 0.0, %v2535
        %v2540 = vsub.f32 0.0, %v2536
        %v2541 = vsub.f32 %v2537, %v2493
        %v2542 = vsub.f32 %v2538, %v2494
        %v2543 = vsub.f32 %v2539, %v2495
        %v2544 = vsub.f32 %v2540, %v2496
        %2546 = vset.pattern.permute.xlu0 6
        %2547 = vperm.xlu0 %2546, %v2541
        %v2548 = vpop.permute.xlu0 %2547
        %2551 = vset.pattern.permute.xlu0 6
        %2552 = vperm.xlu0 %2551, %v2542
        %v2553 = vpop.permute.xlu0 %2552
        %2556 = vset.pattern.permute.xlu0 6
        %2557 = vperm.xlu0 %2556, %v2543
        %v2558 = vpop.permute.xlu0 %2557
        %2561 = vset.pattern.permute.xlu0 6
        %2562 = vperm.xlu0 %2561, %v2544
        %v2563 = vpop.permute.xlu0 %2562
        %v2565 = vld [vmem:[#allocation5 + $0x8e] sm:$0x1]
        %v2566 = vld [vmem:[#allocation5 + $0x10e] sm:$0x1]
        %v2567 = vlaneseq
        %v2568 = vshrl.u32 %v2567, 7
        %v2569 = vsub.s32 0, %v2568
        %v2570 = vrot.slane %v2565, %v2569
        %v2571 = vmul.f32 %v2548, %v2570
        %v2572 = vmul.f32 %v2553, %v2570
        %v2573 = vmul.f32 %v2558, %v2570
        %v2574 = vmul.f32 %v2563, %v2570
        %v2575 = vadd.f32 %v2481, %v2571
        %v2576 = vadd.f32 %v2482, %v2572
        %v2577 = vadd.f32 %v2483, %v2573
        %v2578 = vadd.f32 %v2484, %v2574
        %v2579 = vlaneseq
        %v2580 = vshrl.u32 %v2579, 7
        %v2581 = vsub.s32 0, %v2580
        %v2582 = vrot.slane %v2566, %v2581
        %v2583 = vmul.f32 %v2548, %v2582
        %v2584 = vmul.f32 %v2553, %v2582
        %v2585 = vmul.f32 %v2558, %v2582
        %v2586 = vmul.f32 %v2563, %v2582
        %v2587 = vadd.f32 %v2493, %v2583
        %v2588 = vadd.f32 %v2494, %v2584
        %v2589 = vadd.f32 %v2495, %v2585
        %v2590 = vadd.f32 %v2496, %v2586
        %v2591 = vmax.f32 %v2575, 0.0
        %v2592 = vmax.f32 %v2576, 0.0
        %v2593 = vmax.f32 %v2577, 0.0
        %v2594 = vmax.f32 %v2578, 0.0
        %v2595 = vlaneseq
        %v2596 = vshrl.u32 %v2595, 7
        %v2597 = vsub.s32 0, %v2596
        %v2598 = vrot.slane %v202, %v2597
        %v2599 = vmul.f32 %v2591, %v2598
        %v2600 = vmul.f32 %v2592, %v2598
        %v2601 = vmul.f32 %v2593, %v2598
        %v2602 = vmul.f32 %v2594, %v2598
        %v2603 = vadd.f32 %v2587, %v2599
        %v2604 = vadd.f32 %v2588, %v2600
        %v2605 = vadd.f32 %v2589, %v2601
        %v2606 = vadd.f32 %v2590, %v2602
        %2607 = vst [vmem:[%s176] sm:$0xff] %v2603
        %2608 = vst [vmem:[%s176 + $0x8] sm:$0xff] %v2604
        %2609 = vst [vmem:[%s176 + $0x10] sm:$0xff] %v2605
        %2610 = vst [vmem:[%s176 + $0x18] sm:$0xff] %v2606
        %s2611 = sand.u32 %s75, 1
        %s2612 = scalar_lea.sflag [#allocation4], %s2611
        %s2613 = sand.u32 %s75, 1
        %s2614 = smul.addr %s2613, 32
        %s2615 = scalar_lea.vmem [#allocation7], %s2614
        // Predicated region
        $region37: #{tpu_custom_call.1} parent=27 // pred_check
          %p2616 = pneg %p85
        $region38: #{tpu_custom_call.1} parent=27 // pred_check_branch
          %2618 = sbr.rel (%p2616) target = $region40
        $region39: #{tpu_custom_call.1} parent=27 // pred_region
          %s2619 = smul.u32 4, %s20
          %s2621 = ssub.s32 512, 512
          %2622 = vsyncadd %s2612, %s2621
          %s2623 = smul.addr %s2619, 128
          %s2624 = scalar_lea.hbm %s2, %s2623
          %s2625 = sshll.u32 %s2615, 4
          %s2626 = int_to_ptr.vmem [resolvable:$true] %s2625
          %2631 = dma.vmem_to_hbm [thread:$0]  %s2626, 512, %s2624, %s2612, 128, 128, 8
        $region40: #{tpu_custom_call.1} parent=27 // pred_fallthru
          _
      $region28: #{tpu_custom_call.1} parent=5 // pred_fallthru
        _
      %p2632 = scmp.le.s32.totalorder 2, %s15
      // Predicated region
      $region41: #{tpu_custom_call.1} parent=5 // pred_check
        %p2633 = pneg %p2632
      $region42: #{tpu_custom_call.1} parent=5 // pred_check_branch
        %2635 = sbr.rel (%p2633) target = $region44
      $region43: #{tpu_custom_call.1} parent=5 // pred_region
        %s2636 = ssub.s32 %s15, 2
        // Predicated region
        $region45: #{tpu_custom_call.1} parent=43 // pred_check
          %p2637 = pneg %p91
        $region46: #{tpu_custom_call.1} parent=43 // pred_check_branch
          %2639 = sbr.rel (%p2637) target = $region48
        $region47: #{tpu_custom_call.1} parent=43 // pred_region
          %s2640 = sand.u32 %s76, 1
          %s2641 = scalar_lea.sflag [#allocation4], %s2640
          %s2642 = sand.u32 %s76, 1
          %s2643 = smul.addr %s2642, 32
          %s2644 = scalar_lea.vmem [#allocation7], %s2643
          %2645 = dma.done %s2641, 512
        $region48: #{tpu_custom_call.1} parent=43 // pred_fallthru
          _
      $region44: #{tpu_custom_call.1} parent=5 // pred_fallthru
        _
    $region6: #{tpu_custom_call.1} parent=1 // loop_footer
      %s19 = sadd.s32 1, %s15
    $region7: #{tpu_custom_call.1} parent=1 // loop_footer_branch
      %14 = sbr.rel target = $region3
    $region8: #{tpu_custom_call.1} parent=1 // loop_exit
      _
    %2646 = vsyncpa [#allocation3], 1
    %s2647 = scalar_lea.sflag [#allocation3], 1
    %2648 = vsyncpa %s2647, 1
    %2649 = vsyncpa [#allocation6], 1
    %2650 = vsyncpa [#allocation4], 1
    %s2651 = scalar_lea.sflag [#allocation4], 1
    %2652 = vsyncpa %s2651, 1

</llo_original>
